<compile_context>
chip_gen: v5e
topology: v5e:2x2
jax: 0.10.0
libtpu: 0.0.40
codegen_flags: <defaults>
</compile_context>

<pallas_src>
import functools

import jax
import jax.numpy as jnp
from jax.experimental import pallas as pl
from jax.experimental.pallas import tpu as pltpu

LANE = 128
LOGIT_SCALE = 100.0


def _cdiv(a, b):
    return (a + b - 1) // b


def _round_up(x, m):
    return _cdiv(x, m) * m


# ---------------------------------------------------------------------------
# Kernel 1: combine_features -> LOGIT_SCALE * predicted features (B, D)
# ---------------------------------------------------------------------------
def _pred_kernel(img_ref, txt_ref,
                 wt_ref, bt_ref,                 # text projection
                 wi_ref, bi_ref,                 # image projection
                 wct_ref, wci_ref, bc_ref,       # combiner layer (split halves)
                 wd1t_ref, wd1i_ref, bd1_ref,    # dynamic-scalar hidden (split)
                 wd2_ref, bd2_ref,               # dynamic-scalar output (row form)
                 wo_ref, bo_ref,                 # output layer
                 pred_ref):
    img = img_ref[...]                           # (B, D) f32
    txt = txt_ref[...]                           # (B, D) f32
    cdt = wt_ref.dtype                           # matmul compute dtype (f32 or bf16)

    # projections + ReLU (dropout1/dropout2 = identity at eval)
    txt_p = jnp.maximum(
        jnp.dot(txt.astype(cdt), wt_ref[...],
                preferred_element_type=jnp.float32) + bt_ref[...], 0.0)
    img_p = jnp.maximum(
        jnp.dot(img.astype(cdt), wi_ref[...],
                preferred_element_type=jnp.float32) + bi_ref[...], 0.0)

    txt_pc = txt_p.astype(cdt)
    img_pc = img_p.astype(cdt)

    # raw_combined = concat([txt_p, img_p], -1): implemented as split matmuls.
    combined = jnp.maximum(
        jnp.dot(txt_pc, wct_ref[...], preferred_element_type=jnp.float32)
        + jnp.dot(img_pc, wci_ref[...], preferred_element_type=jnp.float32)
        + bc_ref[...], 0.0)                      # (B, H)   (dropout3 = identity)

    # dynamic scalar: Linear -> ReLU -> (Dropout=id) -> Linear(H,1) -> Sigmoid
    dyn_h = jnp.maximum(
        jnp.dot(txt_pc, wd1t_ref[...], preferred_element_type=jnp.float32)
        + jnp.dot(img_pc, wd1i_ref[...], preferred_element_type=jnp.float32)
        + bd1_ref[...], 0.0)                     # (B, H)
    # (B,H)@(H,1) would be a 1-lane MXU matmul (masked result); do a VPU mul +
    # XLU lane-reduce instead (wd2 stored as a (1, H) row).
    dyn_logit = jnp.sum(dyn_h * wd2_ref[...].astype(jnp.float32),
                        axis=-1, keepdims=True) + bd2_ref[...]       # (B, 1)
    dyn = jax.nn.sigmoid(dyn_logit)

    # predicted features (NOT normalized, per the reference forward()).
    # LOGIT_SCALE is folded here (B x D) so the logits kernel never scales the
    # much larger (TN, D) target tiles.
    pred = (jnp.dot(combined.astype(cdt), wo_ref[...],
                    preferred_element_type=jnp.float32)
            + bo_ref[...]
            + dyn * txt
            + (1.0 - dyn) * img)                 # (B, D) f32
    pred_ref[...] = (LOGIT_SCALE * pred).astype(pred_ref.dtype)


# ---------------------------------------------------------------------------
# Kernel 2: logits = (scaled pred) @ normalize(targets).T   (tiled over N)
# ---------------------------------------------------------------------------
def _logits_kernel(pred_ref, tgt_ref, out_ref):
    tgt = tgt_ref[...].astype(jnp.float32)       # (TN, D), gallery may be bf16 in HBM
    # F.normalize(dim=-1) with eps: per-row scale = 1 / max(||row||, 1e-12).
    sumsq = jnp.sum(tgt * tgt, axis=-1, keepdims=True)
    tgt_n = tgt * jax.lax.rsqrt(jnp.maximum(sumsq, 1e-24))

    # Contract both operands on their LAST dim -> no .T / XLU transpose pass.
    out_ref[...] = jax.lax.dot_general(
        pred_ref[...], tgt_n,
        dimension_numbers=(((1,), (1,)), ((), ())),
        preferred_element_type=jnp.float32)      # (B, TN)


# ---------------------------------------------------------------------------
# Wrapper
# ---------------------------------------------------------------------------
@functools.partial(jax.jit, static_argnames=("tn",))
def combiner_forward(image_features, text_features, target_padded, prepared, *, tn):
    """target_padded must already be padded to a multiple of tn (see
    prepare_targets); returns (B, n_pad) logits -- slice [:, :N] at the caller."""
    B, D = image_features.shape
    n_pad, _ = target_padded.shape
    assert tn % LANE == 0, "target tile must be lane-dense (multiple of 128)"
    assert n_pad % tn == 0, "gallery must be pre-padded to a multiple of tn"
    # TODO(synk): D is assumed lane-dense (true for CLIP 128/640/768); add a
    # D-padding path analogous to projection_dim if other dims are needed.
    assert D % LANE == 0

    vmem_spec = pl.BlockSpec(memory_space=pltpu.MemorySpace.VMEM)
    pred_args = (image_features, text_features,
                 prepared["wt"], prepared["bt"],
                 prepared["wi"], prepared["bi"],
                 prepared["wc_t"], prepared["wc_i"], prepared["bc"],
                 prepared["wd1_t"], prepared["wd1_i"], prepared["bd1"],
                 prepared["wd2_row"], prepared["bd2"],
                 prepared["wo"], prepared["bo"])

    # Predicted features stay f32 regardless of the weight compute dtype
    # (tiny B x D buffer; avoids bf16 round-trip drift on the residual path).
    pred = pl.pallas_call(
        _pred_kernel,
        out_shape=jax.ShapeDtypeStruct((B, D), jnp.float32),
        in_specs=[vmem_spec] * len(pred_args),
        out_specs=vmem_spec,
        compiler_params=pltpu.CompilerParams(vmem_limit_bytes=32 * 1024 * 1024),
    )(*pred_args)

    logits = pl.pallas_call(
        _logits_kernel,
        out_shape=jax.ShapeDtypeStruct((B, n_pad), jnp.float32),
        grid=(n_pad // tn,),
        in_specs=[pl.BlockSpec((B, D), lambda i: (0, 0)),       # pred: resident
                  pl.BlockSpec((tn, D), lambda i: (i, 0))],     # targets: tiled
        out_specs=pl.BlockSpec((B, tn), lambda i: (0, i)),      # lane-dense out
        compiler_params=pltpu.CompilerParams(
            dimension_semantics=("parallel",),                  # v7x: 2 TCs split N
            vmem_limit_bytes=32 * 1024 * 1024),                 # explicit for v5e's 16 MiB default
    )(pred, target_padded)

    return logits


def choose_target_tile(n, *, max_tn=512, min_tiles=4):
    """Largest lane-multiple tile <= max_tn that still yields >= min_tiles tiles
    (keeps both v7x TensorCores busy on the 'parallel' gallery axis)."""
    tn = _round_up(max(1, _cdiv(n, min_tiles)), LANE)
    return max(LANE, min(max_tn, tn))


def prepare_targets(target_features, tn, dtype=jnp.float32):
    """One-time gallery preparation OUTSIDE the jitted forward: pad N to a
    multiple of tn (zero rows -> zero logits, sliced away by the caller) and
    optionally cast to bf16 to halve the dominant HBM stream of the mem-bound
    logits kernel."""
    n, _ = target_features.shape
    n_pad = _round_up(n, tn)
    tgt = jnp.pad(target_features, ((0, n_pad - n), (0, 0)))
    return tgt.astype(dtype)


# ---------------------------------------------------------------------------
# Parameters (PyTorch-shaped) + kernel-layout preparation
# ---------------------------------------------------------------------------
def init_params(key, clip_feature_dim, projection_dim, hidden_dim):
    assert hidden_dim == 2 * projection_dim
    D, P, H = clip_feature_dim, projection_dim, hidden_dim
    ks = jax.random.split(key, 12)

    def lin(kw, kb, fan_in, fan_out):
        w = jax.random.normal(kw, (fan_in, fan_out), jnp.float32) * 0.05
        b = jax.random.normal(kb, (1, fan_out), jnp.float32) * 0.05
        return w, b

    wt, bt = lin(ks[0], ks[1], D, P)        # text_projection_layer
    wi, bi = lin(ks[2], ks[3], D, P)        # image_projection_layer
    wc, bc = lin(ks[4], ks[5], 2 * P, H)    # combiner_layer
    wd1, bd1 = lin(ks[6], ks[7], 2 * P, H)  # dynamic_scalar[0]
    wd2, bd2 = lin(ks[8], ks[9], H, 1)      # dynamic_scalar[3]
    wo, bo = lin(ks[10], ks[11], H, D)      # output_layer
    return dict(wt=wt, bt=bt, wi=wi, bi=bi, wc=wc, bc=bc,
                wd1=wd1, bd1=bd1, wd2=wd2, bd2=bd2, wo=wo, bo=bo)


def prepare_params(p, compute_dtype=jnp.float32):
    """Split concat weights, zero-pad projection_dim to a lane multiple (exact,
    since padded columns are zero), store wd2 as a row for the VPU reduction,
    cast matmul weights to compute_dtype (biases stay f32; f32 accumulation
    in-kernel).  Linear weights are stored PRE-TRANSPOSED as (in, out)."""
    D, P = p["wt"].shape
    p_pad = _round_up(P, LANE)
    dp = p_pad - P

    def pad_cols(w):
        return jnp.pad(w, ((0, 0), (0, dp))) if dp else w

    def pad_rows(w):
        return jnp.pad(w, ((0, dp), (0, 0))) if dp else w

    wc_t, wc_i = p["wc"][:P], p["wc"][P:]
    wd1_t, wd1_i = p["wd1"][:P], p["wd1"][P:]
    cdt = compute_dtype
    return dict(
        wt=pad_cols(p["wt"]).astype(cdt),   bt=pad_cols(p["bt"]),
        wi=pad_cols(p["wi"]).astype(cdt),   bi=pad_cols(p["bi"]),
        wc_t=pad_rows(wc_t).astype(cdt),    wc_i=pad_rows(wc_i).astype(cdt),   bc=p["bc"],
        wd1_t=pad_rows(wd1_t).astype(cdt),  wd1_i=pad_rows(wd1_i).astype(cdt), bd1=p["bd1"],
        wd2_row=p["wd2"].T.astype(jnp.float32),   # (1, H), stays on the VPU path
        bd2=p["bd2"],
        wo=p["wo"].astype(cdt),             bo=p["bo"],
    )


def combiner_reference(image_features, text_features, target_features, p):
    """Pure-JAX reference mirroring the PyTorch forward (eval mode)."""
    txt_p = jax.nn.relu(text_features @ p["wt"] + p["bt"])
    img_p = jax.nn.relu(image_features @ p["wi"] + p["bi"])
    raw = jnp.concatenate([txt_p, img_p], axis=-1)
    combined = jax.nn.relu(raw @ p["wc"] + p["bc"])
    dyn = jax.nn.sigmoid(jax.nn.relu(raw @ p["wd1"] + p["bd1"]) @ p["wd2"] + p["bd2"])
    pred = combined @ p["wo"] + p["bo"] + dyn * text_features + (1 - dyn) * image_features
    tgt = target_features / jnp.linalg.norm(target_features, axis=-1, keepdims=True)
    return LOGIT_SCALE * pred @ tgt.T


if __name__ == "__main__":
    clip_feature_dim = 128
    projection_dim = 64
    hidden_dim = 128
    B = 16     # query batch
    N = 200    # number of target images (not a multiple of 128 -> exercises padding)

    key = jax.random.PRNGKey(0)
    k_img, k_txt, k_tgt, k_par = jax.random.split(key, 4)
    image_features = jax.random.normal(k_img, (B, clip_feature_dim), jnp.float32)
    text_features = jax.random.normal(k_txt, (B, clip_feature_dim), jnp.float32)
    target_features = jax.random.normal(k_tgt, (N, clip_feature_dim), jnp.float32)

    params = init_params(k_par, clip_feature_dim, projection_dim, hidden_dim)
    ref = combiner_reference(image_features, text_features, target_features, params)

    tn = choose_target_tile(N)   # 128 here; up to 512 for large galleries

    # ---- f32 path: bit-close semantics check --------------------------------
    p_f32 = prepare_params(params, jnp.float32)
    tgt_f32 = prepare_targets(target_features, tn, jnp.float32)   # one-time, outside jit
    logits = combiner_forward(image_features, text_features, tgt_f32, p_f32, tn=tn)
    logits = jax.block_until_ready(logits)[:, :N]
    assert logits.shape == (B, N)
    assert jnp.allclose(logits, ref, rtol=1e-4, atol=1e-3), "f32 kernel mismatch vs reference"

    # ---- bf16 path: bf16 weights + bf16 gallery (f32 accumulation & pred) ----
    # Halves the weight and gallery HBM streams; pred stays f32 so the residual
    # path (dyn*txt + (1-dyn)*img) does not round-trip through bf16.
    p_bf16 = prepare_params(params, jnp.bfloat16)
    tgt_bf16 = prepare_targets(target_features, tn, jnp.bfloat16)
    logits_bf = combiner_forward(image_features, text_features, tgt_bf16, p_bf16, tn=tn)
    logits_bf = jax.block_until_ready(logits_bf)[:, :N]
    assert logits_bf.shape == (B, N)
    assert jnp.allclose(logits_bf, ref, rtol=5e-2, atol=1.0), "bf16 kernel drifted too far"

    print("KERNEL_OK")
</pallas_src>

<mosaic_0001>
module attributes {stable_mosaic.version = 11 : i64} {
  func.func @_logits_kernel(%arg0: i32, %arg1: memref<16x128xf32, #tpu.memory_space<vmem>>, %arg2: memref<128x128xf32, #tpu.memory_space<vmem>>, %arg3: memref<16x128xf32, #tpu.memory_space<vmem>>) attributes {dimension_semantics = [#tpu.dimension_semantics<parallel>], iteration_bounds = array<i64: 2>, scalar_prefetch = 0 : i64, scratch_operands = 0 : i64, tpu.core_type = #tpu.core_type<tc>, window_params = [{pipeline_mode = #tpu.pipeline_mode<synchronous>, transform_indices = @transform_0, window_bounds = array<i64: 16, 128>}, {transform_indices = @transform_1, window_bounds = array<i64: 128, 128>}, {transform_indices = @transform_2, window_bounds = array<i64: 16, 128>}]} {
    %c0 = arith.constant 0 : index
    %c0_0 = arith.constant 0 : index
    %0 = vector.load %arg2[%c0, %c0_0] : memref<128x128xf32, #tpu.memory_space<vmem>>, vector<128x128xf32>
    %1 = arith.mulf %0, %0 : vector<128x128xf32>
    %cst = arith.constant dense<0.000000e+00> : vector<128xf32>
    %2 = vector.multi_reduction <add>, %1, %cst [1] : vector<128x128xf32> to vector<128xf32>
    %3 = vector.shape_cast %2 : vector<128xf32> to vector<128x1xf32>
    %cst_1 = arith.constant 1.000000e-24 : f32
    %4 = vector.broadcast %cst_1 : f32 to vector<128x1xf32>
    %5 = arith.maximumf %3, %4 : vector<128x1xf32>
    %6 = math.rsqrt %5 : vector<128x1xf32>
    %7 = vector.broadcast %6 : vector<128x1xf32> to vector<128x128xf32>
    %8 = arith.mulf %0, %7 : vector<128x128xf32>
    %c0_2 = arith.constant 0 : index
    %c0_3 = arith.constant 0 : index
    %9 = vector.load %arg1[%c0_2, %c0_3] : memref<16x128xf32, #tpu.memory_space<vmem>>, vector<16x128xf32>
    %cst_4 = arith.constant dense<0.000000e+00> : vector<16x128xf32>
    %10 = tpu.matmul %9, %8, %cst_4 {dimension_numbers = #tpu.dot_dimension_numbers<[1], [1], [0], [0], [0, 0, 1, 0], [], []>} : vector<16x128xf32>, vector<128x128xf32>, vector<16x128xf32> -> vector<16x128xf32>
    %c0_5 = arith.constant 0 : index
    %c0_6 = arith.constant 0 : index
    %11 = vector.load %arg3[%c0_5, %c0_6] : memref<16x128xf32, #tpu.memory_space<vmem>>, vector<16x128xf32>
    tpu.vector_store %arg3[%c0_5, %c0_6], %10 {strides = array<i32>} : memref<16x128xf32, #tpu.memory_space<vmem>>, vector<16x128xf32>,
    return
  }
  func.func @transform_0(%arg0: i32) -> (i32, i32) {
    %c0_i32 = arith.constant 0 : i32
    %c0_i32_0 = arith.constant 0 : i32
    %c0_i32_1 = arith.constant 0 : i32
    return %c0_i32, %c0_i32_0 : i32, i32
  }
  func.func @transform_1(%arg0: i32) -> (i32, i32) {
    %c0_i32 = arith.constant 0 : i32
    %c0_i32_0 = arith.constant 0 : i32
    return %arg0, %c0_i32 : i32, i32
  }
  func.func @transform_2(%arg0: i32) -> (i32, i32) {
    %c0_i32 = arith.constant 0 : i32
    %c0_i32_0 = arith.constant 0 : i32
    return %c0_i32, %arg0 : i32, i32
  }
}

module attributes {stable_mosaic.version = 11 : i64} {
  func.func @_pred_kernel(%arg0: memref<16x128xf32, #tpu.memory_space<vmem>>, %arg1: memref<16x128xf32, #tpu.memory_space<vmem>>, %arg2: memref<128x128xf32, #tpu.memory_space<vmem>>, %arg3: memref<1x128xf32, #tpu.memory_space<vmem>>, %arg4: memref<128x128xf32, #tpu.memory_space<vmem>>, %arg5: memref<1x128xf32, #tpu.memory_space<vmem>>, %arg6: memref<128x128xf32, #tpu.memory_space<vmem>>, %arg7: memref<128x128xf32, #tpu.memory_space<vmem>>, %arg8: memref<1x128xf32, #tpu.memory_space<vmem>>, %arg9: memref<128x128xf32, #tpu.memory_space<vmem>>, %arg10: memref<128x128xf32, #tpu.memory_space<vmem>>, %arg11: memref<1x128xf32, #tpu.memory_space<vmem>>, %arg12: memref<1x128xf32, #tpu.memory_space<vmem>>, %arg13: memref<1x1xf32, #tpu.memory_space<vmem>>, %arg14: memref<128x128xf32, #tpu.memory_space<vmem>>, %arg15: memref<1x128xf32, #tpu.memory_space<vmem>>, %arg16: memref<16x128xf32, #tpu.memory_space<vmem>>) attributes {dimension_semantics = [], scalar_prefetch = 0 : i64, scratch_operands = 0 : i64, tpu.core_type = #tpu.core_type<tc>} {
    %c0 = arith.constant 0 : index
    %c0_0 = arith.constant 0 : index
    %0 = vector.load %arg0[%c0, %c0_0] : memref<16x128xf32, #tpu.memory_space<vmem>>, vector<16x128xf32>
    %c0_1 = arith.constant 0 : index
    %c0_2 = arith.constant 0 : index
    %1 = vector.load %arg1[%c0_1, %c0_2] : memref<16x128xf32, #tpu.memory_space<vmem>>, vector<16x128xf32>
    %c0_3 = arith.constant 0 : index
    %c0_4 = arith.constant 0 : index
    %2 = vector.load %arg2[%c0_3, %c0_4] : memref<128x128xf32, #tpu.memory_space<vmem>>, vector<128x128xf32>
    %cst = arith.constant dense<0.000000e+00> : vector<16x128xf32>
    %3 = tpu.matmul %1, %2, %cst {dimension_numbers = #tpu.dot_dimension_numbers<[1], [0], [0], [1], [0, 0, 1, 1], [], []>} : vector<16x128xf32>, vector<128x128xf32>, vector<16x128xf32> -> vector<16x128xf32>
    %c0_5 = arith.constant 0 : index
    %c0_6 = arith.constant 0 : index
    %4 = vector.load %arg3[%c0_5, %c0_6] : memref<1x128xf32, #tpu.memory_space<vmem>>, vector<1x128xf32>
    %5 = vector.broadcast %4 : vector<1x128xf32> to vector<16x128xf32>
    %6 = arith.addf %3, %5 : vector<16x128xf32>
    %cst_7 = arith.constant 0.000000e+00 : f32
    %7 = vector.broadcast %cst_7 : f32 to vector<16x128xf32>
    %8 = arith.maximumf %6, %7 : vector<16x128xf32>
    %c0_8 = arith.constant 0 : index
    %c0_9 = arith.constant 0 : index
    %9 = vector.load %arg4[%c0_8, %c0_9] : memref<128x128xf32, #tpu.memory_space<vmem>>, vector<128x128xf32>
    %cst_10 = arith.constant dense<0.000000e+00> : vector<16x128xf32>
    %10 = tpu.matmul %0, %9, %cst_10 {dimension_numbers = #tpu.dot_dimension_numbers<[1], [0], [0], [1], [0, 0, 1, 1], [], []>} : vector<16x128xf32>, vector<128x128xf32>, vector<16x128xf32> -> vector<16x128xf32>
    %c0_11 = arith.constant 0 : index
    %c0_12 = arith.constant 0 : index
    %11 = vector.load %arg5[%c0_11, %c0_12] : memref<1x128xf32, #tpu.memory_space<vmem>>, vector<1x128xf32>
    %12 = vector.broadcast %11 : vector<1x128xf32> to vector<16x128xf32>
    %13 = arith.addf %10, %12 : vector<16x128xf32>
    %cst_13 = arith.constant 0.000000e+00 : f32
    %14 = vector.broadcast %cst_13 : f32 to vector<16x128xf32>
    %15 = arith.maximumf %13, %14 : vector<16x128xf32>
    %c0_14 = arith.constant 0 : index
    %c0_15 = arith.constant 0 : index
    %16 = vector.load %arg6[%c0_14, %c0_15] : memref<128x128xf32, #tpu.memory_space<vmem>>, vector<128x128xf32>
    %cst_16 = arith.constant dense<0.000000e+00> : vector<16x128xf32>
    %17 = tpu.matmul %8, %16, %cst_16 {dimension_numbers = #tpu.dot_dimension_numbers<[1], [0], [0], [1], [0, 0, 1, 1], [], []>} : vector<16x128xf32>, vector<128x128xf32>, vector<16x128xf32> -> vector<16x128xf32>
    %c0_17 = arith.constant 0 : index
    %c0_18 = arith.constant 0 : index
    %18 = vector.load %arg7[%c0_17, %c0_18] : memref<128x128xf32, #tpu.memory_space<vmem>>, vector<128x128xf32>
    %cst_19 = arith.constant dense<0.000000e+00> : vector<16x128xf32>
    %19 = tpu.matmul %15, %18, %cst_19 {dimension_numbers = #tpu.dot_dimension_numbers<[1], [0], [0], [1], [0, 0, 1, 1], [], []>} : vector<16x128xf32>, vector<128x128xf32>, vector<16x128xf32> -> vector<16x128xf32>
    %20 = arith.addf %17, %19 : vector<16x128xf32>
    %c0_20 = arith.constant 0 : index
    %c0_21 = arith.constant 0 : index
    %21 = vector.load %arg8[%c0_20, %c0_21] : memref<1x128xf32, #tpu.memory_space<vmem>>, vector<1x128xf32>
    %22 = vector.broadcast %21 : vector<1x128xf32> to vector<16x128xf32>
    %23 = arith.addf %20, %22 : vector<16x128xf32>
    %cst_22 = arith.constant 0.000000e+00 : f32
    %24 = vector.broadcast %cst_22 : f32 to vector<16x128xf32>
    %25 = arith.maximumf %23, %24 : vector<16x128xf32>
    %c0_23 = arith.constant 0 : index
    %c0_24 = arith.constant 0 : index
    %26 = vector.load %arg9[%c0_23, %c0_24] : memref<128x128xf32, #tpu.memory_space<vmem>>, vector<128x128xf32>
    %cst_25 = arith.constant dense<0.000000e+00> : vector<16x128xf32>
    %27 = tpu.matmul %8, %26, %cst_25 {dimension_numbers = #tpu.dot_dimension_numbers<[1], [0], [0], [1], [0, 0, 1, 1], [], []>} : vector<16x128xf32>, vector<128x128xf32>, vector<16x128xf32> -> vector<16x128xf32>
    %c0_26 = arith.constant 0 : index
    %c0_27 = arith.constant 0 : index
    %28 = vector.load %arg10[%c0_26, %c0_27] : memref<128x128xf32, #tpu.memory_space<vmem>>, vector<128x128xf32>
    %cst_28 = arith.constant dense<0.000000e+00> : vector<16x128xf32>
    %29 = tpu.matmul %15, %28, %cst_28 {dimension_numbers = #tpu.dot_dimension_numbers<[1], [0], [0], [1], [0, 0, 1, 1], [], []>} : vector<16x128xf32>, vector<128x128xf32>, vector<16x128xf32> -> vector<16x128xf32>
    %30 = arith.addf %27, %29 : vector<16x128xf32>
    %c0_29 = arith.constant 0 : index
    %c0_30 = arith.constant 0 : index
    %31 = vector.load %arg11[%c0_29, %c0_30] : memref<1x128xf32, #tpu.memory_space<vmem>>, vector<1x128xf32>
    %32 = vector.broadcast %31 : vector<1x128xf32> to vector<16x128xf32>
    %33 = arith.addf %30, %32 : vector<16x128xf32>
    %cst_31 = arith.constant 0.000000e+00 : f32
    %34 = vector.broadcast %cst_31 : f32 to vector<16x128xf32>
    %35 = arith.maximumf %33, %34 : vector<16x128xf32>
    %c0_32 = arith.constant 0 : index
    %c0_33 = arith.constant 0 : index
    %36 = vector.load %arg12[%c0_32, %c0_33] : memref<1x128xf32, #tpu.memory_space<vmem>>, vector<1x128xf32>
    %37 = vector.broadcast %36 : vector<1x128xf32> to vector<16x128xf32>
    %38 = arith.mulf %35, %37 : vector<16x128xf32>
    %cst_34 = arith.constant dense<0.000000e+00> : vector<16xf32>
    %39 = vector.multi_reduction <add>, %38, %cst_34 [1] : vector<16x128xf32> to vector<16xf32>
    %40 = vector.shape_cast %39 : vector<16xf32> to vector<16x1xf32>
    %c0_35 = arith.constant 0 : index
    %c0_36 = arith.constant 0 : index
    %41 = vector.load %arg13[%c0_35, %c0_36] : memref<1x1xf32, #tpu.memory_space<vmem>>, vector<1x1xf32>
    %42 = vector.broadcast %41 : vector<1x1xf32> to vector<16x1xf32>
    %43 = arith.addf %40, %42 : vector<16x1xf32>
    %44 = arith.negf %43 : vector<16x1xf32>
    %45 = math.exp %44 : vector<16x1xf32>
    %cst_37 = arith.constant 1.000000e+00 : f32
    %46 = vector.broadcast %cst_37 : f32 to vector<16x1xf32>
    %47 = arith.addf %46, %45 : vector<16x1xf32>
    %48 = arith.divf %46, %47 : vector<16x1xf32>
    %c0_38 = arith.constant 0 : index
    %c0_39 = arith.constant 0 : index
    %49 = vector.load %arg14[%c0_38, %c0_39] : memref<128x128xf32, #tpu.memory_space<vmem>>, vector<128x128xf32>
    %cst_40 = arith.constant dense<0.000000e+00> : vector<16x128xf32>
    %50 = tpu.matmul %25, %49, %cst_40 {dimension_numbers = #tpu.dot_dimension_numbers<[1], [0], [0], [1], [0, 0, 1, 1], [], []>} : vector<16x128xf32>, vector<128x128xf32>, vector<16x128xf32> -> vector<16x128xf32>
    %c0_41 = arith.constant 0 : index
    %c0_42 = arith.constant 0 : index
    %51 = vector.load %arg15[%c0_41, %c0_42] : memref<1x128xf32, #tpu.memory_space<vmem>>, vector<1x128xf32>
    %52 = vector.broadcast %51 : vector<1x128xf32> to vector<16x128xf32>
    %53 = arith.addf %50, %52 : vector<16x128xf32>
    %54 = vector.broadcast %48 : vector<16x1xf32> to vector<16x128xf32>
    %55 = arith.mulf %54, %1 : vector<16x128xf32>
    %56 = arith.addf %53, %55 : vector<16x128xf32>
    %cst_43 = arith.constant 1.000000e+00 : f32
    %57 = vector.broadcast %cst_43 : f32 to vector<16x1xf32>
    %58 = arith.subf %57, %48 : vector<16x1xf32>
    %59 = vector.broadcast %58 : vector<16x1xf32> to vector<16x128xf32>
    %60 = arith.mulf %59, %0 : vector<16x128xf32>
    %61 = arith.addf %56, %60 : vector<16x128xf32>
    %cst_44 = arith.constant 1.000000e+02 : f32
    %62 = vector.broadcast %cst_44 : f32 to vector<16x128xf32>
    %63 = arith.mulf %62, %61 : vector<16x128xf32>
    %c0_45 = arith.constant 0 : index
    %c0_46 = arith.constant 0 : index
    %64 = vector.load %arg16[%c0_45, %c0_46] : memref<16x128xf32, #tpu.memory_space<vmem>>, vector<16x128xf32>
    tpu.vector_store %arg16[%c0_45, %c0_46], %63 {strides = array<i32>} : memref<16x128xf32, #tpu.memory_space<vmem>>, vector<16x128xf32>,
    return
  }
}

</mosaic_0001>

<llo_original>
// kernel: combiner_forward.2
$region0: #{combiner_forward.2}
  #allocation0 [shape = 'u32[]', space=smem, size = 0x4, offset = 0x4, fixed_abs, tag = 'smem constant byte address 0x4 - core index']
  #allocation1 [shape = 'u32[72,128]{1,0:T(1,128)}', space=vmem, size = 0x9000, scoped, tag = 'internal scratch']
  #allocation2 [shape = 'f32[1,1]{1,0:T(1,128)S(1)}', space=vmem, size = 0x200, scoped, tag = 'scoped memory for combiner_forward.2']
  %s0 = inlined_call_operand.hbm [shape: f32[16,128], index: 0, kind: input, shape index: {}]
  %s1 = inlined_call_operand.hbm [shape: f32[16,128], index: 1, kind: input, shape index: {}]
  %s2 = inlined_call_operand.hbm [shape: f32[128,128], index: 2, kind: input, shape index: {}]
  %s3 = inlined_call_operand.vmem [shape: f32[1,128], index: 3, kind: input, shape index: {}]
  %s4 = inlined_call_operand.hbm [shape: f32[128,128], index: 4, kind: input, shape index: {}]
  %s5 = inlined_call_operand.vmem [shape: f32[1,128], index: 5, kind: input, shape index: {}]
  %s6 = inlined_call_operand.hbm [shape: f32[128,128], index: 6, kind: input, shape index: {}]
  %s7 = inlined_call_operand.hbm [shape: f32[128,128], index: 7, kind: input, shape index: {}]
  %s8 = inlined_call_operand.vmem [shape: f32[1,128], index: 8, kind: input, shape index: {}]
  %s9 = inlined_call_operand.hbm [shape: f32[128,128], index: 9, kind: input, shape index: {}]
  %s10 = inlined_call_operand.hbm [shape: f32[128,128], index: 10, kind: input, shape index: {}]
  %s11 = inlined_call_operand.vmem [shape: f32[1,128], index: 11, kind: input, shape index: {}]
  %s12 = inlined_call_operand.vmem [shape: f32[1,128], index: 12, kind: input, shape index: {}]
  %s13 = inlined_call_operand.<no memory space> [shape: f32[1,1], index: 13, kind: input, shape index: {}]
  %s14 = inlined_call_operand.hbm [shape: f32[128,128], index: 14, kind: input, shape index: {}]
  %s15 = inlined_call_operand.vmem [shape: f32[1,128], index: 15, kind: input, shape index: {}]
  %s16 = inlined_call_operand.vmem [shape: f32[16,128], index: 16, kind: output, shape index: {}]
  %s17 = sld [smem:[#allocation0]]
  $region110: #{combiner_forward.2} parent=0
    _
  %s19 = ssub.s32 1, %s17
  %s20 = scalar_select 0, %s19, %s17
  %v21 = vstv %s13
  %22 = vst [vmem:[#allocation2] sm:$0x1] %v21
  $region1: #{combiner_forward.2} parent=0
    #allocation3 [shape = 'u8[8192]{0}', space=vmem, size = 0x2000, scoped, tag = 'input window, operand 0, single buffered']
    #allocation4 [shape = 's32[1]{0}', space=sflag, size = 0x4, scoped, tag = 'scoped memory for combiner_forward.2']
    #allocation5 [shape = 'u8[8192]{0}', space=vmem, size = 0x2000, scoped, tag = 'input window, operand 1, single buffered']
    #allocation6 [shape = 's32[1]{0}', space=sflag, size = 0x4, scoped, tag = 'scoped memory for combiner_forward.2']
    #allocation7 [shape = 'u8[65536]{0}', space=vmem, size = 0x10000, scoped, tag = 'input window, operand 2, single buffered']
    #allocation8 [shape = 'u8[65536]{0}', space=vmem, size = 0x10000, scoped, tag = 'input window, operand 4, single buffered']
    #allocation9 [shape = 's32[1]{0}', space=sflag, size = 0x4, scoped, tag = 'scoped memory for combiner_forward.2']
    #allocation10 [shape = 'u8[65536]{0}', space=vmem, size = 0x10000, scoped, tag = 'input window, operand 6, single buffered']
    #allocation11 [shape = 'u8[65536]{0}', space=vmem, size = 0x10000, scoped, tag = 'input window, operand 7, single buffered']
    #allocation12 [shape = 's32[1]{0}', space=sflag, size = 0x4, scoped, tag = 'scoped memory for combiner_forward.2']
    #allocation13 [shape = 'u8[65536]{0}', space=vmem, size = 0x10000, scoped, tag = 'input window, operand 9, single buffered']
    #allocation14 [shape = 'u8[65536]{0}', space=vmem, size = 0x10000, scoped, tag = 'input window, operand 10, single buffered']
    #allocation15 [shape = 's32[1]{0}', space=sflag, size = 0x4, scoped, tag = 'scoped memory for combiner_forward.2']
    #allocation16 [shape = 'u8[65536]{0}', space=vmem, size = 0x10000, scoped, tag = 'input window, operand 14, single buffered']
    %23 = vsyncpa [#allocation4], 0
    %24 = vsyncpa [#allocation6], 0
    %25 = vsyncpa [#allocation9], 0
    %26 = vsyncpa [#allocation12], 0
    %27 = vsyncpa [#allocation15], 0
    // Predicated region
    $region2: #{combiner_forward.2} parent=1 // pred_check
      _
    $region3: #{combiner_forward.2} parent=1 // pred_check_branch
      %29 = sbr.rel (0) target = $region5
    $region4: #{combiner_forward.2} parent=1 // pred_region
      %31 = vsyncadd [#allocation4], 0
      %s32 = sshll.u32 %s0, 4
      %s33 = int_to_ptr.hbm [resolvable:$true] %s32
      %s34 = sshll.u32 [#allocation3], 4
      %s35 = int_to_ptr.vmem [resolvable:$true] %s34
      %40 = dma.hbm_to_vmem [thread:$0]  %s33, 256, %s35, [#allocation4], 128, 128, 8
    $region5: #{combiner_forward.2} parent=1 // pred_fallthru
      _
    // Predicated region
    $region6: #{combiner_forward.2} parent=1 // pred_check
      _
    $region7: #{combiner_forward.2} parent=1 // pred_check_branch
      %42 = sbr.rel (0) target = $region9
    $region8: #{combiner_forward.2} parent=1 // pred_region
      %44 = vsyncadd [#allocation6], 0
      %s45 = sshll.u32 %s1, 4
      %s46 = int_to_ptr.hbm [resolvable:$true] %s45
      %s47 = sshll.u32 [#allocation5], 4
      %s48 = int_to_ptr.vmem [resolvable:$true] %s47
      %53 = dma.hbm_to_vmem [thread:$0]  %s46, 256, %s48, [#allocation6], 128, 128, 8
    $region9: #{combiner_forward.2} parent=1 // pred_fallthru
      _
    // Predicated region
    $region10: #{combiner_forward.2} parent=1 // pred_check
      _
    $region11: #{combiner_forward.2} parent=1 // pred_check_branch
      %55 = sbr.rel (0) target = $region13
    $region12: #{combiner_forward.2} parent=1 // pred_region
      %57 = vsyncadd [#allocation6], 0
      %s58 = sshll.u32 %s2, 4
      %s59 = int_to_ptr.hbm [resolvable:$true] %s58
      %s60 = sshll.u32 [#allocation7], 4
      %s61 = int_to_ptr.vmem [resolvable:$true] %s60
      %66 = dma.hbm_to_vmem [thread:$0]  %s59, 2048, %s61, [#allocation6], 128, 128, 8
    $region13: #{combiner_forward.2} parent=1 // pred_fallthru
      _
    // Predicated region
    $region14: #{combiner_forward.2} parent=1 // pred_check
      _
    $region15: #{combiner_forward.2} parent=1 // pred_check_branch
      %68 = sbr.rel (0) target = $region17
    $region16: #{combiner_forward.2} parent=1 // pred_region
      _
    $region17: #{combiner_forward.2} parent=1 // pred_fallthru
      _
    // Predicated region
    $region18: #{combiner_forward.2} parent=1 // pred_check
      _
    $region19: #{combiner_forward.2} parent=1 // pred_check_branch
      %70 = sbr.rel (0) target = $region21
    $region20: #{combiner_forward.2} parent=1 // pred_region
      %72 = vsyncadd [#allocation9], 0
      %s73 = sshll.u32 %s4, 4
      %s74 = int_to_ptr.hbm [resolvable:$true] %s73
      %s75 = sshll.u32 [#allocation8], 4
      %s76 = int_to_ptr.vmem [resolvable:$true] %s75
      %81 = dma.hbm_to_vmem [thread:$0]  %s74, 2048, %s76, [#allocation9], 128, 128, 8
    $region21: #{combiner_forward.2} parent=1 // pred_fallthru
      _
    // Predicated region
    $region22: #{combiner_forward.2} parent=1 // pred_check
      _
    $region23: #{combiner_forward.2} parent=1 // pred_check_branch
      %83 = sbr.rel (0) target = $region25
    $region24: #{combiner_forward.2} parent=1 // pred_region
      _
    $region25: #{combiner_forward.2} parent=1 // pred_fallthru
      _
    // Predicated region
    $region26: #{combiner_forward.2} parent=1 // pred_check
      _
    $region27: #{combiner_forward.2} parent=1 // pred_check_branch
      %85 = sbr.rel (0) target = $region29
    $region28: #{combiner_forward.2} parent=1 // pred_region
      %87 = vsyncadd [#allocation9], 0
      %s88 = sshll.u32 %s6, 4
      %s89 = int_to_ptr.hbm [resolvable:$true] %s88
      %s90 = sshll.u32 [#allocation10], 4
      %s91 = int_to_ptr.vmem [resolvable:$true] %s90
      %96 = dma.hbm_to_vmem [thread:$0]  %s89, 2048, %s91, [#allocation9], 128, 128, 8
    $region29: #{combiner_forward.2} parent=1 // pred_fallthru
      _
    // Predicated region
    $region30: #{combiner_forward.2} parent=1 // pred_check
      _
    $region31: #{combiner_forward.2} parent=1 // pred_check_branch
      %98 = sbr.rel (0) target = $region33
    $region32: #{combiner_forward.2} parent=1 // pred_region
      %100 = vsyncadd [#allocation12], 0
      %s101 = sshll.u32 %s7, 4
      %s102 = int_to_ptr.hbm [resolvable:$true] %s101
      %s103 = sshll.u32 [#allocation11], 4
      %s104 = int_to_ptr.vmem [resolvable:$true] %s103
      %109 = dma.hbm_to_vmem [thread:$0]  %s102, 2048, %s104, [#allocation12], 128, 128, 8
    $region33: #{combiner_forward.2} parent=1 // pred_fallthru
      _
    // Predicated region
    $region34: #{combiner_forward.2} parent=1 // pred_check
      _
    $region35: #{combiner_forward.2} parent=1 // pred_check_branch
      %111 = sbr.rel (0) target = $region37
    $region36: #{combiner_forward.2} parent=1 // pred_region
      _
    $region37: #{combiner_forward.2} parent=1 // pred_fallthru
      _
    // Predicated region
    $region38: #{combiner_forward.2} parent=1 // pred_check
      _
    $region39: #{combiner_forward.2} parent=1 // pred_check_branch
      %113 = sbr.rel (0) target = $region41
    $region40: #{combiner_forward.2} parent=1 // pred_region
      %115 = vsyncadd [#allocation12], 0
      %s116 = sshll.u32 %s9, 4
      %s117 = int_to_ptr.hbm [resolvable:$true] %s116
      %s118 = sshll.u32 [#allocation13], 4
      %s119 = int_to_ptr.vmem [resolvable:$true] %s118
      %124 = dma.hbm_to_vmem [thread:$0]  %s117, 2048, %s119, [#allocation12], 128, 128, 8
    $region41: #{combiner_forward.2} parent=1 // pred_fallthru
      _
    // Predicated region
    $region42: #{combiner_forward.2} parent=1 // pred_check
      _
    $region43: #{combiner_forward.2} parent=1 // pred_check_branch
      %126 = sbr.rel (0) target = $region45
    $region44: #{combiner_forward.2} parent=1 // pred_region
      %128 = vsyncadd [#allocation15], 0
      %s129 = sshll.u32 %s10, 4
      %s130 = int_to_ptr.hbm [resolvable:$true] %s129
      %s131 = sshll.u32 [#allocation14], 4
      %s132 = int_to_ptr.vmem [resolvable:$true] %s131
      %137 = dma.hbm_to_vmem [thread:$0]  %s130, 2048, %s132, [#allocation15], 128, 128, 8
    $region45: #{combiner_forward.2} parent=1 // pred_fallthru
      _
    // Predicated region
    $region46: #{combiner_forward.2} parent=1 // pred_check
      _
    $region47: #{combiner_forward.2} parent=1 // pred_check_branch
      %139 = sbr.rel (0) target = $region49
    $region48: #{combiner_forward.2} parent=1 // pred_region
      _
    $region49: #{combiner_forward.2} parent=1 // pred_fallthru
      _
    // Predicated region
    $region50: #{combiner_forward.2} parent=1 // pred_check
      _
    $region51: #{combiner_forward.2} parent=1 // pred_check_branch
      %141 = sbr.rel (0) target = $region53
    $region52: #{combiner_forward.2} parent=1 // pred_region
      _
    $region53: #{combiner_forward.2} parent=1 // pred_fallthru
      _
    // Predicated region
    $region54: #{combiner_forward.2} parent=1 // pred_check
      _
    $region55: #{combiner_forward.2} parent=1 // pred_check_branch
      %143 = sbr.rel (0) target = $region57
    $region56: #{combiner_forward.2} parent=1 // pred_region
      _
    $region57: #{combiner_forward.2} parent=1 // pred_fallthru
      _
    // Predicated region
    $region58: #{combiner_forward.2} parent=1 // pred_check
      _
    $region59: #{combiner_forward.2} parent=1 // pred_check_branch
      %145 = sbr.rel (0) target = $region61
    $region60: #{combiner_forward.2} parent=1 // pred_region
      %147 = vsyncadd [#allocation15], 0
      %s148 = sshll.u32 %s14, 4
      %s149 = int_to_ptr.hbm [resolvable:$true] %s148
      %s150 = sshll.u32 [#allocation16], 4
      %s151 = int_to_ptr.vmem [resolvable:$true] %s150
      %156 = dma.hbm_to_vmem [thread:$0]  %s149, 2048, %s151, [#allocation15], 128, 128, 8
    $region61: #{combiner_forward.2} parent=1 // pred_fallthru
      _
    // Predicated region
    $region62: #{combiner_forward.2} parent=1 // pred_check
      _
    $region63: #{combiner_forward.2} parent=1 // pred_check_branch
      %158 = sbr.rel (0) target = $region65
    $region64: #{combiner_forward.2} parent=1 // pred_region
      _
    $region65: #{combiner_forward.2} parent=1 // pred_fallthru
      _
    // Predicated region
    $region66: #{combiner_forward.2} parent=1 // pred_check
      _
    $region67: #{combiner_forward.2} parent=1 // pred_check_branch
      %160 = sbr.rel (0) target = $region69
    $region68: #{combiner_forward.2} parent=1 // pred_region
      %162 = dma.done [#allocation4], 256
    $region69: #{combiner_forward.2} parent=1 // pred_fallthru
      _
    // Predicated region
    $region70: #{combiner_forward.2} parent=1 // pred_check
      _
    $region71: #{combiner_forward.2} parent=1 // pred_check_branch
      %164 = sbr.rel (0) target = $region73
    $region72: #{combiner_forward.2} parent=1 // pred_region
      %166 = dma.done [#allocation6], 256
    $region73: #{combiner_forward.2} parent=1 // pred_fallthru
      _
    // Predicated region
    $region74: #{combiner_forward.2} parent=1 // pred_check
      _
    $region75: #{combiner_forward.2} parent=1 // pred_check_branch
      %168 = sbr.rel (0) target = $region77
    $region76: #{combiner_forward.2} parent=1 // pred_region
      %170 = dma.done [#allocation6], 2048
    $region77: #{combiner_forward.2} parent=1 // pred_fallthru
      _
    // Predicated region
    $region78: #{combiner_forward.2} parent=1 // pred_check
      _
    $region79: #{combiner_forward.2} parent=1 // pred_check_branch
      %172 = sbr.rel (0) target = $region81
    $region80: #{combiner_forward.2} parent=1 // pred_region
      %174 = dma.done [#allocation9], 2048
    $region81: #{combiner_forward.2} parent=1 // pred_fallthru
      _
    // Predicated region
    $region82: #{combiner_forward.2} parent=1 // pred_check
      _
    $region83: #{combiner_forward.2} parent=1 // pred_check_branch
      %176 = sbr.rel (0) target = $region85
    $region84: #{combiner_forward.2} parent=1 // pred_region
      %178 = dma.done [#allocation9], 2048
    $region85: #{combiner_forward.2} parent=1 // pred_fallthru
      _
    // Predicated region
    $region86: #{combiner_forward.2} parent=1 // pred_check
      _
    $region87: #{combiner_forward.2} parent=1 // pred_check_branch
      %180 = sbr.rel (0) target = $region89
    $region88: #{combiner_forward.2} parent=1 // pred_region
      %182 = dma.done [#allocation12], 2048
    $region89: #{combiner_forward.2} parent=1 // pred_fallthru
      _
    // Predicated region
    $region90: #{combiner_forward.2} parent=1 // pred_check
      _
    $region91: #{combiner_forward.2} parent=1 // pred_check_branch
      %184 = sbr.rel (0) target = $region93
    $region92: #{combiner_forward.2} parent=1 // pred_region
      %186 = dma.done [#allocation12], 2048
    $region93: #{combiner_forward.2} parent=1 // pred_fallthru
      _
    // Predicated region
    $region94: #{combiner_forward.2} parent=1 // pred_check
      _
    $region95: #{combiner_forward.2} parent=1 // pred_check_branch
      %188 = sbr.rel (0) target = $region97
    $region96: #{combiner_forward.2} parent=1 // pred_region
      %190 = dma.done [#allocation15], 2048
    $region97: #{combiner_forward.2} parent=1 // pred_fallthru
      _
    // Predicated region
    $region98: #{combiner_forward.2} parent=1 // pred_check
      _
    $region99: #{combiner_forward.2} parent=1 // pred_check_branch
      %192 = sbr.rel (0) target = $region101
    $region100: #{combiner_forward.2} parent=1 // pred_region
      %194 = dma.done [#allocation15], 2048
    $region101: #{combiner_forward.2} parent=1 // pred_fallthru
      _
    %v195 = vld [vmem:[#allocation3] sm:$0xff]
    %v196 = vld [vmem:[#allocation3 + $0x8] sm:$0xff]
    %v197 = vld [vmem:[#allocation5] sm:$0xff]
    %v198 = vld [vmem:[#allocation5 + $0x8] sm:$0xff]
    %v199 = vld [vmem:[#allocation7] sm:$0xff]
    %v200 = vld [vmem:[#allocation7 + $0x8] sm:$0xff]
    %v201 = vld [vmem:[#allocation7 + $0x10] sm:$0xff]
    %v202 = vld [vmem:[#allocation7 + $0x18] sm:$0xff]
    %v203 = vld [vmem:[#allocation7 + $0x20] sm:$0xff]
    %v204 = vld [vmem:[#allocation7 + $0x28] sm:$0xff]
    %v205 = vld [vmem:[#allocation7 + $0x30] sm:$0xff]
    %v206 = vld [vmem:[#allocation7 + $0x38] sm:$0xff]
    %v207 = vld [vmem:[#allocation7 + $0x40] sm:$0xff]
    %v208 = vld [vmem:[#allocation7 + $0x48] sm:$0xff]
    %v209 = vld [vmem:[#allocation7 + $0x50] sm:$0xff]
    %v210 = vld [vmem:[#allocation7 + $0x58] sm:$0xff]
    %v211 = vld [vmem:[#allocation7 + $0x60] sm:$0xff]
    %v212 = vld [vmem:[#allocation7 + $0x68] sm:$0xff]
    %v213 = vld [vmem:[#allocation7 + $0x70] sm:$0xff]
    %v214 = vld [vmem:[#allocation7 + $0x78] sm:$0xff]
    %v215 = vld [vmem:[%s3] sm:$0x1]
    %v217 = vperm.slane %v215, 0
    %219 = vmatpush.msra.mxu0 %v214
    %220 = vmatpush.msra.mxu0 %v213
    %221 = vmatpush.msra.mxu0 %v212
    %222 = vmatpush.msra.mxu0 %v211
    %223 = vmatpush.msra.mxu0 %v210
    %224 = vmatpush.msra.mxu0 %v209
    %225 = vmatpush.msra.mxu0 %v208
    %226 = vmatpush.msra.mxu0 %v207
    %227 = vmatpush.msra.mxu0 %v206
    %228 = vmatpush.msra.mxu0 %v205
    %229 = vmatpush.msra.mxu0 %v204
    %230 = vmatpush.msra.mxu0 %v203
    %231 = vmatpush.msra.mxu0 %v202
    %232 = vmatpush.msra.mxu0 %v201
    %233 = vmatpush.msra.mxu0 %v200
    %234 = vmatpush.msra.mxu0 %v199
    %235 = vmatmul.f32.gmra.mxu0 %v197
    %v236 = vpop.f32.mrf.mxu0
    %v237 = vadd.f32 %v217, %v236
    %238 = vmatmul.f32.gmra.mxu0 %v198
    %v239 = vpop.f32.mrf.mxu0
    %v240 = vadd.f32 %v217, %v239
    %241 = vdwg.mxu0
    %v242 = vmax.f32 %v237, 0.0
    %v243 = vmax.f32 %v240, 0.0
    %v244 = vld [vmem:[#allocation8] sm:$0xff]
    %v245 = vld [vmem:[#allocation8 + $0x8] sm:$0xff]
    %v246 = vld [vmem:[#allocation8 + $0x10] sm:$0xff]
    %v247 = vld [vmem:[#allocation8 + $0x18] sm:$0xff]
    %v248 = vld [vmem:[#allocation8 + $0x20] sm:$0xff]
    %v249 = vld [vmem:[#allocation8 + $0x28] sm:$0xff]
    %v250 = vld [vmem:[#allocation8 + $0x30] sm:$0xff]
    %v251 = vld [vmem:[#allocation8 + $0x38] sm:$0xff]
    %v252 = vld [vmem:[#allocation8 + $0x40] sm:$0xff]
    %v253 = vld [vmem:[#allocation8 + $0x48] sm:$0xff]
    %v254 = vld [vmem:[#allocation8 + $0x50] sm:$0xff]
    %v255 = vld [vmem:[#allocation8 + $0x58] sm:$0xff]
    %v256 = vld [vmem:[#allocation8 + $0x60] sm:$0xff]
    %v257 = vld [vmem:[#allocation8 + $0x68] sm:$0xff]
    %v258 = vld [vmem:[#allocation8 + $0x70] sm:$0xff]
    %v259 = vld [vmem:[#allocation8 + $0x78] sm:$0xff]
    %v260 = vld [vmem:[%s5] sm:$0x1]
    %v262 = vperm.slane %v260, 0
    %264 = vmatpush.msra.mxu0 %v259
    %265 = vmatpush.msra.mxu0 %v258
    %266 = vmatpush.msra.mxu0 %v257
    %267 = vmatpush.msra.mxu0 %v256
    %268 = vmatpush.msra.mxu0 %v255
    %269 = vmatpush.msra.mxu0 %v254
    %270 = vmatpush.msra.mxu0 %v253
    %271 = vmatpush.msra.mxu0 %v252
    %272 = vmatpush.msra.mxu0 %v251
    %273 = vmatpush.msra.mxu0 %v250
    %274 = vmatpush.msra.mxu0 %v249
    %275 = vmatpush.msra.mxu0 %v248
    %276 = vmatpush.msra.mxu0 %v247
    %277 = vmatpush.msra.mxu0 %v246
    %278 = vmatpush.msra.mxu0 %v245
    %279 = vmatpush.msra.mxu0 %v244
    %280 = vmatmul.f32.gmra.mxu0 %v195
    %v281 = vpop.f32.mrf.mxu0
    %v282 = vadd.f32 %v262, %v281
    %283 = vmatmul.f32.gmra.mxu0 %v196
    %v284 = vpop.f32.mrf.mxu0
    %v285 = vadd.f32 %v262, %v284
    %286 = vdwg.mxu0
    %v287 = vmax.f32 %v282, 0.0
    %v288 = vmax.f32 %v285, 0.0
    %v289 = vld [vmem:[#allocation10] sm:$0xff]
    %v290 = vld [vmem:[#allocation10 + $0x8] sm:$0xff]
    %v291 = vld [vmem:[#allocation10 + $0x10] sm:$0xff]
    %v292 = vld [vmem:[#allocation10 + $0x18] sm:$0xff]
    %v293 = vld [vmem:[#allocation10 + $0x20] sm:$0xff]
    %v294 = vld [vmem:[#allocation10 + $0x28] sm:$0xff]
    %v295 = vld [vmem:[#allocation10 + $0x30] sm:$0xff]
    %v296 = vld [vmem:[#allocation10 + $0x38] sm:$0xff]
    %v297 = vld [vmem:[#allocation10 + $0x40] sm:$0xff]
    %v298 = vld [vmem:[#allocation10 + $0x48] sm:$0xff]
    %v299 = vld [vmem:[#allocation10 + $0x50] sm:$0xff]
    %v300 = vld [vmem:[#allocation10 + $0x58] sm:$0xff]
    %v301 = vld [vmem:[#allocation10 + $0x60] sm:$0xff]
    %v302 = vld [vmem:[#allocation10 + $0x68] sm:$0xff]
    %v303 = vld [vmem:[#allocation10 + $0x70] sm:$0xff]
    %v304 = vld [vmem:[#allocation10 + $0x78] sm:$0xff]
    %v305 = vld [vmem:[#allocation11] sm:$0xff]
    %v306 = vld [vmem:[#allocation11 + $0x8] sm:$0xff]
    %v307 = vld [vmem:[#allocation11 + $0x10] sm:$0xff]
    %v308 = vld [vmem:[#allocation11 + $0x18] sm:$0xff]
    %v309 = vld [vmem:[#allocation11 + $0x20] sm:$0xff]
    %v310 = vld [vmem:[#allocation11 + $0x28] sm:$0xff]
    %v311 = vld [vmem:[#allocation11 + $0x30] sm:$0xff]
    %v312 = vld [vmem:[#allocation11 + $0x38] sm:$0xff]
    %v313 = vld [vmem:[#allocation11 + $0x40] sm:$0xff]
    %v314 = vld [vmem:[#allocation11 + $0x48] sm:$0xff]
    %v315 = vld [vmem:[#allocation11 + $0x50] sm:$0xff]
    %v316 = vld [vmem:[#allocation11 + $0x58] sm:$0xff]
    %v317 = vld [vmem:[#allocation11 + $0x60] sm:$0xff]
    %v318 = vld [vmem:[#allocation11 + $0x68] sm:$0xff]
    %v319 = vld [vmem:[#allocation11 + $0x70] sm:$0xff]
    %v320 = vld [vmem:[#allocation11 + $0x78] sm:$0xff]
    %321 = vmatpush.msra.mxu0 %v320
    %322 = vmatpush.msra.mxu0 %v319
    %323 = vmatpush.msra.mxu0 %v318
    %324 = vmatpush.msra.mxu0 %v317
    %325 = vmatpush.msra.mxu0 %v316
    %326 = vmatpush.msra.mxu0 %v315
    %327 = vmatpush.msra.mxu0 %v314
    %328 = vmatpush.msra.mxu0 %v313
    %329 = vmatpush.msra.mxu0 %v312
    %330 = vmatpush.msra.mxu0 %v311
    %331 = vmatpush.msra.mxu0 %v310
    %332 = vmatpush.msra.mxu0 %v309
    %333 = vmatpush.msra.mxu0 %v308
    %334 = vmatpush.msra.mxu0 %v307
    %335 = vmatpush.msra.mxu0 %v306
    %336 = vmatpush.msra.mxu0 %v305
    %337 = vmatmul.f32.gmra.mxu0 %v287
    %v338 = vpop.f32.mrf.mxu0
    %v339 = vadd.f32 0.0, %v338
    %340 = vmatmul.f32.gmra.mxu0 %v288
    %v341 = vpop.f32.mrf.mxu0
    %v342 = vadd.f32 0.0, %v341
    %343 = vdwg.mxu0
    %344 = vmatpush.msra.mxu0 %v304
    %345 = vmatpush.msra.mxu0 %v303
    %346 = vmatpush.msra.mxu0 %v302
    %347 = vmatpush.msra.mxu0 %v301
    %348 = vmatpush.msra.mxu0 %v300
    %349 = vmatpush.msra.mxu0 %v299
    %350 = vmatpush.msra.mxu0 %v298
    %351 = vmatpush.msra.mxu0 %v297
    %352 = vmatpush.msra.mxu0 %v296
    %353 = vmatpush.msra.mxu0 %v295
    %354 = vmatpush.msra.mxu0 %v294
    %355 = vmatpush.msra.mxu0 %v293
    %356 = vmatpush.msra.mxu0 %v292
    %357 = vmatpush.msra.mxu0 %v291
    %358 = vmatpush.msra.mxu0 %v290
    %359 = vmatpush.msra.mxu0 %v289
    %360 = vmatmul.f32.gmra.mxu0 %v242
    %v361 = vpop.f32.mrf.mxu0
    %v362 = vadd.f32 %v339, %v361
    %363 = vmatmul.f32.gmra.mxu0 %v243
    %v364 = vpop.f32.mrf.mxu0
    %v365 = vadd.f32 %v342, %v364
    %366 = vdwg.mxu0
    %v367 = vld [vmem:[%s8] sm:$0x1]
    %v369 = vperm.slane %v367, 0
    %v371 = vadd.f32 %v362, %v369
    %v372 = vadd.f32 %v365, %v369
    %v373 = vmax.f32 %v371, 0.0
    %v374 = vmax.f32 %v372, 0.0
    %v375 = vld [vmem:[#allocation13] sm:$0xff]
    %v376 = vld [vmem:[#allocation13 + $0x8] sm:$0xff]
    %v377 = vld [vmem:[#allocation13 + $0x10] sm:$0xff]
    %v378 = vld [vmem:[#allocation13 + $0x18] sm:$0xff]
    %v379 = vld [vmem:[#allocation13 + $0x20] sm:$0xff]
    %v380 = vld [vmem:[#allocation13 + $0x28] sm:$0xff]
    %v381 = vld [vmem:[#allocation13 + $0x30] sm:$0xff]
    %v382 = vld [vmem:[#allocation13 + $0x38] sm:$0xff]
    %v383 = vld [vmem:[#allocation13 + $0x40] sm:$0xff]
    %v384 = vld [vmem:[#allocation13 + $0x48] sm:$0xff]
    %v385 = vld [vmem:[#allocation13 + $0x50] sm:$0xff]
    %v386 = vld [vmem:[#allocation13 + $0x58] sm:$0xff]
    %v387 = vld [vmem:[#allocation13 + $0x60] sm:$0xff]
    %v388 = vld [vmem:[#allocation13 + $0x68] sm:$0xff]
    %v389 = vld [vmem:[#allocation13 + $0x70] sm:$0xff]
    %v390 = vld [vmem:[#allocation13 + $0x78] sm:$0xff]
    %v391 = vld [vmem:[#allocation14] sm:$0xff]
    %v392 = vld [vmem:[#allocation14 + $0x8] sm:$0xff]
    %v393 = vld [vmem:[#allocation14 + $0x10] sm:$0xff]
    %v394 = vld [vmem:[#allocation14 + $0x18] sm:$0xff]
    %v395 = vld [vmem:[#allocation14 + $0x20] sm:$0xff]
    %v396 = vld [vmem:[#allocation14 + $0x28] sm:$0xff]
    %v397 = vld [vmem:[#allocation14 + $0x30] sm:$0xff]
    %v398 = vld [vmem:[#allocation14 + $0x38] sm:$0xff]
    %v399 = vld [vmem:[#allocation14 + $0x40] sm:$0xff]
    %v400 = vld [vmem:[#allocation14 + $0x48] sm:$0xff]
    %v401 = vld [vmem:[#allocation14 + $0x50] sm:$0xff]
    %v402 = vld [vmem:[#allocation14 + $0x58] sm:$0xff]
    %v403 = vld [vmem:[#allocation14 + $0x60] sm:$0xff]
    %v404 = vld [vmem:[#allocation14 + $0x68] sm:$0xff]
    %v405 = vld [vmem:[#allocation14 + $0x70] sm:$0xff]
    %v406 = vld [vmem:[#allocation14 + $0x78] sm:$0xff]
    %407 = vmatpush.msra.mxu0 %v406
    %408 = vmatpush.msra.mxu0 %v405
    %409 = vmatpush.msra.mxu0 %v404
    %410 = vmatpush.msra.mxu0 %v403
    %411 = vmatpush.msra.mxu0 %v402
    %412 = vmatpush.msra.mxu0 %v401
    %413 = vmatpush.msra.mxu0 %v400
    %414 = vmatpush.msra.mxu0 %v399
    %415 = vmatpush.msra.mxu0 %v398
    %416 = vmatpush.msra.mxu0 %v397
    %417 = vmatpush.msra.mxu0 %v396
    %418 = vmatpush.msra.mxu0 %v395
    %419 = vmatpush.msra.mxu0 %v394
    %420 = vmatpush.msra.mxu0 %v393
    %421 = vmatpush.msra.mxu0 %v392
    %422 = vmatpush.msra.mxu0 %v391
    %423 = vmatmul.f32.gmra.mxu0 %v287
    %v424 = vpop.f32.mrf.mxu0
    %v425 = vadd.f32 0.0, %v424
    %426 = vmatmul.f32.gmra.mxu0 %v288
    %v427 = vpop.f32.mrf.mxu0
    %v428 = vadd.f32 0.0, %v427
    %429 = vdwg.mxu0
    %430 = vmatpush.msra.mxu0 %v390
    %431 = vmatpush.msra.mxu0 %v389
    %432 = vmatpush.msra.mxu0 %v388
    %433 = vmatpush.msra.mxu0 %v387
    %434 = vmatpush.msra.mxu0 %v386
    %435 = vmatpush.msra.mxu0 %v385
    %436 = vmatpush.msra.mxu0 %v384
    %437 = vmatpush.msra.mxu0 %v383
    %438 = vmatpush.msra.mxu0 %v382
    %439 = vmatpush.msra.mxu0 %v381
    %440 = vmatpush.msra.mxu0 %v380
    %441 = vmatpush.msra.mxu0 %v379
    %442 = vmatpush.msra.mxu0 %v378
    %443 = vmatpush.msra.mxu0 %v377
    %444 = vmatpush.msra.mxu0 %v376
    %445 = vmatpush.msra.mxu0 %v375
    %446 = vmatmul.f32.gmra.mxu0 %v242
    %v447 = vpop.f32.mrf.mxu0
    %v448 = vadd.f32 %v425, %v447
    %449 = vmatmul.f32.gmra.mxu0 %v243
    %v450 = vpop.f32.mrf.mxu0
    %v451 = vadd.f32 %v428, %v450
    %452 = vdwg.mxu0
    %v453 = vld [vmem:[%s11] sm:$0x1]
    %v455 = vperm.slane %v453, 0
    %v457 = vadd.f32 %v448, %v455
    %v458 = vadd.f32 %v451, %v455
    %v459 = vmax.f32 %v457, 0.0
    %v460 = vmax.f32 %v458, 0.0
    %v461 = vld [vmem:[%s12] sm:$0x1]
    %v463 = vperm.slane %v461, 0
    %v465 = vmul.f32 %v459, %v463
    %v466 = vmul.f32 %v460, %v463
    %467 = vadd.xlane.f32.xlu0 %v465
    %v468 = vpop.xlane.xlu0 %467
    %469 = vadd.xlane.f32.xlu0 %v466
    %v470 = vpop.xlane.xlu0 %469
    %v471 = vld [vmem:[#allocation2] sm:$0x1]
    %v473 = vperm.slane %v471, 0
    %v475 = vadd.f32 %v468, %v473
    %v476 = vadd.f32 %v470, %v473
    %v477 = vxor.u32 %v475, 2147483648
    %v478 = vxor.u32 %v476, 2147483648
    %v479 = vmul.f32 %v477, 1.442695
    %v480 = vpow.pop %v479
    %v481 = vmul.f32 %v478, 1.442695
    %v482 = vpow.pop %v481
    %v483 = vadd.f32 %v480, 1.0
    %v484 = vadd.f32 %v482, 1.0
    %v485 = vrcp.pop %v483
    %v486 = vmul.f32 %v483, %v485
    %v487 = vsub.f32 1.0, %v486
    %v488 = vmul.f32 %v485, %v487
    %v489 = vadd.f32 %v485, %v488
    %vm490 = vweird.f32 %v483
    %vm491 = vweird.f32 %v485
    %vm492 = vmor %vm490, %vm491
    %v493 = vsel %vm492, %v485, %v489
    %v494 = vand.u32 2147483647, %v483
    %vm495 = vcmp.eq.f32.partialorder %v494, 8.507059e+37
    %v496 = vand.u32 %v483, 2147483648
    %v497 = vor.u32 1.1754944e-38, %v496
    %v498 = vsel %vm495, %v497, %v493
    %v499 = vmul.f32 1.0, %v498
    %v500 = vrcp.pop %v484
    %v501 = vmul.f32 %v484, %v500
    %v502 = vsub.f32 1.0, %v501
    %v503 = vmul.f32 %v500, %v502
    %v504 = vadd.f32 %v500, %v503
    %vm505 = vweird.f32 %v484
    %vm506 = vweird.f32 %v500
    %vm507 = vmor %vm505, %vm506
    %v508 = vsel %vm507, %v500, %v504
    %v509 = vand.u32 2147483647, %v484
    %vm510 = vcmp.eq.f32.partialorder %v509, 8.507059e+37
    %v511 = vand.u32 %v484, 2147483648
    %v512 = vor.u32 1.1754944e-38, %v511
    %v513 = vsel %vm510, %v512, %v508
    %v514 = vmul.f32 1.0, %v513
    %v515 = vld [vmem:[#allocation16] sm:$0xff]
    %v516 = vld [vmem:[#allocation16 + $0x8] sm:$0xff]
    %v517 = vld [vmem:[#allocation16 + $0x10] sm:$0xff]
    %v518 = vld [vmem:[#allocation16 + $0x18] sm:$0xff]
    %v519 = vld [vmem:[#allocation16 + $0x20] sm:$0xff]
    %v520 = vld [vmem:[#allocation16 + $0x28] sm:$0xff]
    %v521 = vld [vmem:[#allocation16 + $0x30] sm:$0xff]
    %v522 = vld [vmem:[#allocation16 + $0x38] sm:$0xff]
    %v523 = vld [vmem:[#allocation16 + $0x40] sm:$0xff]
    %v524 = vld [vmem:[#allocation16 + $0x48] sm:$0xff]
    %v525 = vld [vmem:[#allocation16 + $0x50] sm:$0xff]
    %v526 = vld [vmem:[#allocation16 + $0x58] sm:$0xff]
    %v527 = vld [vmem:[#allocation16 + $0x60] sm:$0xff]
    %v528 = vld [vmem:[#allocation16 + $0x68] sm:$0xff]
    %v529 = vld [vmem:[#allocation16 + $0x70] sm:$0xff]
    %v530 = vld [vmem:[#allocation16 + $0x78] sm:$0xff]
    %v531 = vld [vmem:[%s15] sm:$0x1]
    %v533 = vperm.slane %v531, 0
    %535 = vmatpush.msra.mxu0 %v530
    %536 = vmatpush.msra.mxu0 %v529
    %537 = vmatpush.msra.mxu0 %v528
    %538 = vmatpush.msra.mxu0 %v527
    %539 = vmatpush.msra.mxu0 %v526
    %540 = vmatpush.msra.mxu0 %v525
    %541 = vmatpush.msra.mxu0 %v524
    %542 = vmatpush.msra.mxu0 %v523
    %543 = vmatpush.msra.mxu0 %v522
    %544 = vmatpush.msra.mxu0 %v521
    %545 = vmatpush.msra.mxu0 %v520
    %546 = vmatpush.msra.mxu0 %v519
    %547 = vmatpush.msra.mxu0 %v518
    %548 = vmatpush.msra.mxu0 %v517
    %549 = vmatpush.msra.mxu0 %v516
    %550 = vmatpush.msra.mxu0 %v515
    %551 = vmatmul.f32.gmra.mxu0 %v373
    %v552 = vpop.f32.mrf.mxu0
    %v553 = vadd.f32 %v533, %v552
    %554 = vmatmul.f32.gmra.mxu0 %v374
    %v555 = vpop.f32.mrf.mxu0
    %v556 = vadd.f32 %v533, %v555
    %557 = vdwg.mxu0
    %559 = vset.pattern.permute.xlu0 0
    %560 = vperm.xlu0 %559, %v499
    %v561 = vpop.permute.xlu0 %560
    %564 = vset.pattern.permute.xlu0 0
    %565 = vperm.xlu0 %564, %v514
    %v566 = vpop.permute.xlu0 %565
    %v568 = vmul.f32 %v561, %v197
    %v569 = vmul.f32 %v566, %v198
    %v570 = vadd.f32 %v553, %v568
    %v571 = vadd.f32 %v556, %v569
    %v572 = vsub.f32 1.0, %v499
    %v573 = vsub.f32 1.0, %v514
    %575 = vset.pattern.permute.xlu0 0
    %576 = vperm.xlu0 %575, %v572
    %v577 = vpop.permute.xlu0 %576
    %580 = vset.pattern.permute.xlu0 0
    %581 = vperm.xlu0 %580, %v573
    %v582 = vpop.permute.xlu0 %581
    %v584 = vmul.f32 %v577, %v195
    %v585 = vmul.f32 %v582, %v196
    %v586 = vadd.f32 %v570, %v584
    %v587 = vadd.f32 %v571, %v585
    %v588 = vmul.f32 %v586, 100.0
    %v589 = vmul.f32 %v587, 100.0
    %590 = vst [vmem:[%s16] sm:$0xff] %v588
    %591 = vst [vmem:[%s16 + $0x8] sm:$0xff] %v589
    // Predicated region
    $region102: #{combiner_forward.2} parent=1 // pred_check
      _
    $region103: #{combiner_forward.2} parent=1 // pred_check_branch
      %593 = sbr.rel (0) target = $region105
    $region104: #{combiner_forward.2} parent=1 // pred_region
      _
    $region105: #{combiner_forward.2} parent=1 // pred_fallthru
      _
    // Predicated region
    $region106: #{combiner_forward.2} parent=1 // pred_check
      _
    $region107: #{combiner_forward.2} parent=1 // pred_check_branch
      %595 = sbr.rel (0) target = $region109
    $region108: #{combiner_forward.2} parent=1 // pred_region
      _
    $region109: #{combiner_forward.2} parent=1 // pred_fallthru
      _
    %596 = vsyncpa [#allocation4], 1
    %597 = vsyncpa [#allocation6], 1
    %598 = vsyncpa [#allocation9], 1
    %599 = vsyncpa [#allocation12], 1
    %600 = vsyncpa [#allocation15], 1

// kernel: combiner_forward.3
$region0: #{combiner_forward.3}
  #allocation0 [shape = 'u32[]', space=smem, size = 0x4, offset = 0x4, fixed_abs, tag = 'smem constant byte address 0x4 - core index']
  #allocation1 [shape = 'u32[72,128]{1,0:T(1,128)}', space=vmem, size = 0x9000, scoped, tag = 'internal scratch']
  %s0 = inlined_call_operand.vmem [shape: f32[16,128], index: 0, kind: input, shape index: {}]
  %s1 = inlined_call_operand.hbm [shape: f32[256,128], index: 1, kind: input, shape index: {}]
  %s2 = inlined_call_operand.hbm [shape: f32[16,256], index: 2, kind: output, shape index: {}]
  %s3 = sld [smem:[#allocation0]]
  $region45: #{combiner_forward.3} parent=0
    _
  %s5 = ssub.s32 1, %s3
  %s6 = scalar_select 0, %s5, %s3
  $region1: #{combiner_forward.3} parent=0
    #allocation2 [shape = 'u8[131072]{0}', space=vmem, size = 0x20000, scoped, tag = 'input window, operand 1']
    #allocation3 [shape = 's32[2]{0}', space=sflag, size = 0x8, scoped, tag = 'scoped memory for combiner_forward.3']
    #allocation4 [shape = 's32[2]{0}', space=sflag, size = 0x8, scoped, tag = 'scoped memory for combiner_forward.3']
    #allocation5 [shape = 'u8[16384]{0}', space=vmem, size = 0x4000, scoped, tag = 'output window, operand 0']
    %7 = vsyncpa [#allocation3], 0
    %s8 = scalar_lea.sflag [#allocation3], 1
    %9 = vsyncpa %s8, 0
    %10 = vsyncpa [#allocation4], 0
    %s11 = scalar_lea.sflag [#allocation4], 1
    %12 = vsyncpa %s11, 0
    loop: start=0, step=1, limit=4
    $region2: #{combiner_forward.3} parent=1 // loop_pre_header
      _
    $region3: #{combiner_forward.3} parent=1 // loop_header
      %s14 = sphi 0, %s18
      %p15 = scmp.ge.s32.totalorder %s14, 4
      %s22 = sphi 0, %s22
      %s24 = sphi 0, %s22
      %s25 = sphi 0, %s24
      %s39 = sphi 0, %s25
      %s45 = sphi 0, %s47
      %s48 = sphi 0, %s45
      %s49 = sphi 0, %s48
      %s65 = sphi 0, %s49
      %s71 = sphi 0, %s73
      %s74 = sphi 0, %s71
      %s75 = sphi 0, %s74
      %s91 = sphi 0, %s75
    $region4: #{combiner_forward.3} parent=1 // loop_header_branch
      %17 = sbr.rel (%p15) target = $region8
    $region5: #{combiner_forward.3} parent=1 // loop_body
      %s19 = ssub.s32 %s14, 1
      %s20 = ssub.s32 %s14, 2
      %s21 = sadd.s32 %s14, 1
      %s23 = sadd.s32 %s22, 1
      %p26 = scmp.eq.s32.totalorder %s14, 1
      %p27 = scmp.ne.s32.totalorder %s22, %s24
      %p28 = scmp.eq.s32.totalorder %s14, 0
      %p29 = por %p27, %p28
      %p30 = scmp.ne.s32.totalorder %s22, %s24
      %p31 = scmp.eq.s32.totalorder %s19, 1
      %p32 = por %p30, %p31
      %p33 = scmp.ne.s32.totalorder %s24, %s25
      %p34 = scmp.eq.s32.totalorder %s19, 0
      %p35 = por %p33, %p34
      %p36 = scmp.ne.s32.totalorder %s24, %s25
      %p37 = scmp.eq.s32.totalorder %s20, 1
      %p38 = por %p36, %p37
      %p40 = scmp.ne.s32.totalorder %s25, %s39
      %p41 = scmp.eq.s32.totalorder %s20, 0
      %p42 = por %p40, %p41
      %s43 = ssub.s32 %s14, %s21
      %p44 = scmp.eq.s32.totalorder %s43, 0
      %s46 = sadd.s32 %s45, 1
      %s47 = scalar_select %p44, %s45, %s46
      %p50 = pneg %p44
      %p51 = scmp.eq.s32.totalorder %s14, 1
      %p52 = por %p50, %p51
      %p53 = scmp.ne.s32.totalorder %s45, %s48
      %p54 = scmp.eq.s32.totalorder %s14, 0
      %p55 = por %p53, %p54
      %p56 = scmp.ne.s32.totalorder %s45, %s48
      %p57 = scmp.eq.s32.totalorder %s19, 1
      %p58 = por %p56, %p57
      %p59 = scmp.ne.s32.totalorder %s48, %s49
      %p60 = scmp.eq.s32.totalorder %s19, 0
      %p61 = por %p59, %p60
      %p62 = scmp.ne.s32.totalorder %s48, %s49
      %p63 = scmp.eq.s32.totalorder %s20, 1
      %p64 = por %p62, %p63
      %p66 = scmp.ne.s32.totalorder %s49, %s65
      %p67 = scmp.eq.s32.totalorder %s20, 0
      %p68 = por %p66, %p67
      %s69 = ssub.s32 %s14, %s21
      %p70 = scmp.eq.s32.totalorder %s69, 0
      %s72 = sadd.s32 %s71, 1
      %s73 = scalar_select %p70, %s71, %s72
      %p76 = pneg %p70
      %p77 = scmp.eq.s32.totalorder %s14, 1
      %p78 = por %p76, %p77
      %p79 = scmp.ne.s32.totalorder %s71, %s74
      %p80 = scmp.eq.s32.totalorder %s14, 0
      %p81 = por %p79, %p80
      %p82 = scmp.ne.s32.totalorder %s71, %s74
      %p83 = scmp.eq.s32.totalorder %s19, 1
      %p84 = por %p82, %p83
      %p85 = scmp.ne.s32.totalorder %s74, %s75
      %p86 = scmp.eq.s32.totalorder %s19, 0
      %p87 = por %p85, %p86
      %p88 = scmp.ne.s32.totalorder %s74, %s75
      %p89 = scmp.eq.s32.totalorder %s20, 1
      %p90 = por %p88, %p89
      %p92 = scmp.ne.s32.totalorder %s75, %s91
      %p93 = scmp.eq.s32.totalorder %s20, 0
      %p94 = por %p92, %p93
      %p95 = scmp.le.s32.totalorder 1, %s14
      %p96 = scmp.lt.s32.totalorder %s14, 3
      %p97 = pnand %p95, %p96
      %p98 = pneg %p97
      // Predicated region
      $region9: #{combiner_forward.3} parent=5 // pred_check
        _
      $region10: #{combiner_forward.3} parent=5 // pred_check_branch
        %100 = sbr.rel (%p97) target = $region12
      $region11: #{combiner_forward.3} parent=5 // pred_region
        %s101 = ssub.s32 %s14, 1
        // Predicated region
        $region13: #{combiner_forward.3} parent=11 // pred_check
          %p102 = pneg %p35
        $region14: #{combiner_forward.3} parent=11 // pred_check_branch
          %104 = sbr.rel (%p102) target = $region16
        $region15: #{combiner_forward.3} parent=11 // pred_region
          _
        $region16: #{combiner_forward.3} parent=11 // pred_fallthru
          _
      $region12: #{combiner_forward.3} parent=5 // pred_fallthru
        _
      %p105 = scmp.lt.s32.totalorder %s14, 2
      // Predicated region
      $region17: #{combiner_forward.3} parent=5 // pred_check
        %p106 = pneg %p105
      $region18: #{combiner_forward.3} parent=5 // pred_check_branch
        %108 = sbr.rel (%p106) target = $region20
      $region19: #{combiner_forward.3} parent=5 // pred_region
        // Predicated region
        $region21: #{combiner_forward.3} parent=19 // pred_check
          %p109 = pneg %p55
        $region22: #{combiner_forward.3} parent=19 // pred_check_branch
          %111 = sbr.rel (%p109) target = $region24
        $region23: #{combiner_forward.3} parent=19 // pred_region
          %s112 = sand.u32 %s45, 1
          %s113 = scalar_lea.sflag [#allocation3], %s112
          %s114 = sand.u32 %s45, 1
          %s115 = smul.addr %s114, 128
          %s116 = scalar_lea.vmem [#allocation2], %s115
          %s117 = smul.u32 16, %s14
          %119 = vsyncadd %s113, 0
          %s120 = smul.addr %s117, 8
          %s121 = scalar_lea.hbm %s1, %s120
          %s122 = sshll.u32 %s121, 4
          %s123 = int_to_ptr.hbm [resolvable:$true] %s122
          %s124 = sshll.u32 %s116, 4
          %s125 = int_to_ptr.vmem [resolvable:$true] %s124
          %130 = dma.hbm_to_vmem [thread:$0]  %s123, 2048, %s125, %s113, 128, 128, 8
        $region24: #{combiner_forward.3} parent=19 // pred_fallthru
          _
      $region20: #{combiner_forward.3} parent=5 // pred_fallthru
        _
      %p131 = scmp.le.s32.totalorder 1, %s14
      %p132 = scmp.lt.s32.totalorder %s14, 3
      %p133 = pnand %p131, %p132
      %p134 = pneg %p133
      // Predicated region
      $region25: #{combiner_forward.3} parent=5 // pred_check
        _
      $region26: #{combiner_forward.3} parent=5 // pred_check_branch
        %136 = sbr.rel (%p133) target = $region28
      $region27: #{combiner_forward.3} parent=5 // pred_region
        %s137 = ssub.s32 %s14, 1
        %s138 = sand.u32 %s48, 1
        %s139 = scalar_lea.sflag [#allocation3], %s138
        %s140 = sand.u32 %s48, 1
        %s141 = smul.addr %s140, 128
        %s142 = scalar_lea.vmem [#allocation2], %s141
        // Predicated region
        $region29: #{combiner_forward.3} parent=27 // pred_check
          %p143 = pneg %p61
        $region30: #{combiner_forward.3} parent=27 // pred_check_branch
          %145 = sbr.rel (%p143) target = $region32
        $region31: #{combiner_forward.3} parent=27 // pred_region
          %147 = dma.done %s139, 2048
        $region32: #{combiner_forward.3} parent=27 // pred_fallthru
          _
        %p148 = pneg %p35
        %p149 = pneg %p32
        %s150 = sand.u32 %s48, 1
        %s151 = scalar_lea.sflag [#allocation3], %s150
        %s152 = sand.u32 %s48, 1
        %s153 = smul.addr %s152, 128
        %s154 = scalar_lea.vmem [#allocation2], %s153
        %p155 = pneg %p61
        %p156 = pneg %p58
        %p157 = pneg %p87
        %p158 = pneg %p84
        %s159 = sand.u32 %s74, 1
        %s160 = scalar_lea.sflag [#allocation4], %s159
        %s161 = sand.u32 %s74, 1
        %s162 = smul.addr %s161, 16
        %s163 = scalar_lea.vmem [#allocation5], %s162
        %s164 = smul.u32 16, %s19
        %v165 = vld [vmem:[%s142] sm:$0xff]
        %v166 = vld [vmem:[%s142 + $0x8] sm:$0xff]
        %v167 = vld [vmem:[%s142 + $0x10] sm:$0xff]
        %v168 = vld [vmem:[%s142 + $0x18] sm:$0xff]
        %v169 = vld [vmem:[%s142 + $0x20] sm:$0xff]
        %v170 = vld [vmem:[%s142 + $0x28] sm:$0xff]
        %v171 = vld [vmem:[%s142 + $0x30] sm:$0xff]
        %v172 = vld [vmem:[%s142 + $0x38] sm:$0xff]
        %v173 = vld [vmem:[%s142 + $0x40] sm:$0xff]
        %v174 = vld [vmem:[%s142 + $0x48] sm:$0xff]
        %v175 = vld [vmem:[%s142 + $0x50] sm:$0xff]
        %v176 = vld [vmem:[%s142 + $0x58] sm:$0xff]
        %v177 = vld [vmem:[%s142 + $0x60] sm:$0xff]
        %v178 = vld [vmem:[%s142 + $0x68] sm:$0xff]
        %v179 = vld [vmem:[%s142 + $0x70] sm:$0xff]
        %v180 = vld [vmem:[%s142 + $0x78] sm:$0xff]
        %v181 = vmul.f32 %v165, %v165
        %v182 = vmul.f32 %v166, %v166
        %v183 = vmul.f32 %v167, %v167
        %v184 = vmul.f32 %v168, %v168
        %v185 = vmul.f32 %v169, %v169
        %v186 = vmul.f32 %v170, %v170
        %v187 = vmul.f32 %v171, %v171
        %v188 = vmul.f32 %v172, %v172
        %v189 = vmul.f32 %v173, %v173
        %v190 = vmul.f32 %v174, %v174
        %v191 = vmul.f32 %v175, %v175
        %v192 = vmul.f32 %v176, %v176
        %v193 = vmul.f32 %v177, %v177
        %v194 = vmul.f32 %v178, %v178
        %v195 = vmul.f32 %v179, %v179
        %v196 = vmul.f32 %v180, %v180
        %197 = vadd.xlane.f32.xlu0 %v181
        %v198 = vpop.xlane.xlu0 %197
        %199 = vadd.xlane.f32.xlu0 %v182
        %v200 = vpop.xlane.xlu0 %199
        %201 = vadd.xlane.f32.xlu0 %v183
        %v202 = vpop.xlane.xlu0 %201
        %203 = vadd.xlane.f32.xlu0 %v184
        %v204 = vpop.xlane.xlu0 %203
        %205 = vadd.xlane.f32.xlu0 %v185
        %v206 = vpop.xlane.xlu0 %205
        %207 = vadd.xlane.f32.xlu0 %v186
        %v208 = vpop.xlane.xlu0 %207
        %209 = vadd.xlane.f32.xlu0 %v187
        %v210 = vpop.xlane.xlu0 %209
        %211 = vadd.xlane.f32.xlu0 %v188
        %v212 = vpop.xlane.xlu0 %211
        %213 = vadd.xlane.f32.xlu0 %v189
        %v214 = vpop.xlane.xlu0 %213
        %215 = vadd.xlane.f32.xlu0 %v190
        %v216 = vpop.xlane.xlu0 %215
        %217 = vadd.xlane.f32.xlu0 %v191
        %v218 = vpop.xlane.xlu0 %217
        %219 = vadd.xlane.f32.xlu0 %v192
        %v220 = vpop.xlane.xlu0 %219
        %221 = vadd.xlane.f32.xlu0 %v193
        %v222 = vpop.xlane.xlu0 %221
        %223 = vadd.xlane.f32.xlu0 %v194
        %v224 = vpop.xlane.xlu0 %223
        %225 = vadd.xlane.f32.xlu0 %v195
        %v226 = vpop.xlane.xlu0 %225
        %227 = vadd.xlane.f32.xlu0 %v196
        %v228 = vpop.xlane.xlu0 %227
        %v229 = vmax.f32 %v198, 1e-24
        %v230 = vmax.f32 %v200, 1e-24
        %v231 = vmax.f32 %v202, 1e-24
        %v232 = vmax.f32 %v204, 1e-24
        %v233 = vmax.f32 %v206, 1e-24
        %v234 = vmax.f32 %v208, 1e-24
        %v235 = vmax.f32 %v210, 1e-24
        %v236 = vmax.f32 %v212, 1e-24
        %v237 = vmax.f32 %v214, 1e-24
        %v238 = vmax.f32 %v216, 1e-24
        %v239 = vmax.f32 %v218, 1e-24
        %v240 = vmax.f32 %v220, 1e-24
        %v241 = vmax.f32 %v222, 1e-24
        %v242 = vmax.f32 %v224, 1e-24
        %v243 = vmax.f32 %v226, 1e-24
        %v244 = vmax.f32 %v228, 1e-24
        %v245 = vrsqrt.pop %v229
        %v246 = vmul.f32 %v245, %v229
        %v247 = vmul.f32 %v246, %v245
        %v248 = vmul.f32 0.5, %v247
        %v249 = vsub.f32 1.5, %v248
        %v250 = vmul.f32 %v245, %v249
        %vm251 = vweird.f32 %v229
        %vm252 = vweird.f32 %v245
        %vm253 = vmor %vm251, %vm252
        %v254 = vsel %vm253, %v245, %v250
        %v255 = vrsqrt.pop %v230
        %v256 = vmul.f32 %v255, %v230
        %v257 = vmul.f32 %v256, %v255
        %v258 = vmul.f32 0.5, %v257
        %v259 = vsub.f32 1.5, %v258
        %v260 = vmul.f32 %v255, %v259
        %vm261 = vweird.f32 %v230
        %vm262 = vweird.f32 %v255
        %vm263 = vmor %vm261, %vm262
        %v264 = vsel %vm263, %v255, %v260
        %v265 = vrsqrt.pop %v231
        %v266 = vmul.f32 %v265, %v231
        %v267 = vmul.f32 %v266, %v265
        %v268 = vmul.f32 0.5, %v267
        %v269 = vsub.f32 1.5, %v268
        %v270 = vmul.f32 %v265, %v269
        %vm271 = vweird.f32 %v231
        %vm272 = vweird.f32 %v265
        %vm273 = vmor %vm271, %vm272
        %v274 = vsel %vm273, %v265, %v270
        %v275 = vrsqrt.pop %v232
        %v276 = vmul.f32 %v275, %v232
        %v277 = vmul.f32 %v276, %v275
        %v278 = vmul.f32 0.5, %v277
        %v279 = vsub.f32 1.5, %v278
        %v280 = vmul.f32 %v275, %v279
        %vm281 = vweird.f32 %v232
        %vm282 = vweird.f32 %v275
        %vm283 = vmor %vm281, %vm282
        %v284 = vsel %vm283, %v275, %v280
        %v285 = vrsqrt.pop %v233
        %v286 = vmul.f32 %v285, %v233
        %v287 = vmul.f32 %v286, %v285
        %v288 = vmul.f32 0.5, %v287
        %v289 = vsub.f32 1.5, %v288
        %v290 = vmul.f32 %v285, %v289
        %vm291 = vweird.f32 %v233
        %vm292 = vweird.f32 %v285
        %vm293 = vmor %vm291, %vm292
        %v294 = vsel %vm293, %v285, %v290
        %v295 = vrsqrt.pop %v234
        %v296 = vmul.f32 %v295, %v234
        %v297 = vmul.f32 %v296, %v295
        %v298 = vmul.f32 0.5, %v297
        %v299 = vsub.f32 1.5, %v298
        %v300 = vmul.f32 %v295, %v299
        %vm301 = vweird.f32 %v234
        %vm302 = vweird.f32 %v295
        %vm303 = vmor %vm301, %vm302
        %v304 = vsel %vm303, %v295, %v300
        %v305 = vrsqrt.pop %v235
        %v306 = vmul.f32 %v305, %v235
        %v307 = vmul.f32 %v306, %v305
        %v308 = vmul.f32 0.5, %v307
        %v309 = vsub.f32 1.5, %v308
        %v310 = vmul.f32 %v305, %v309
        %vm311 = vweird.f32 %v235
        %vm312 = vweird.f32 %v305
        %vm313 = vmor %vm311, %vm312
        %v314 = vsel %vm313, %v305, %v310
        %v315 = vrsqrt.pop %v236
        %v316 = vmul.f32 %v315, %v236
        %v317 = vmul.f32 %v316, %v315
        %v318 = vmul.f32 0.5, %v317
        %v319 = vsub.f32 1.5, %v318
        %v320 = vmul.f32 %v315, %v319
        %vm321 = vweird.f32 %v236
        %vm322 = vweird.f32 %v315
        %vm323 = vmor %vm321, %vm322
        %v324 = vsel %vm323, %v315, %v320
        %v325 = vrsqrt.pop %v237
        %v326 = vmul.f32 %v325, %v237
        %v327 = vmul.f32 %v326, %v325
        %v328 = vmul.f32 0.5, %v327
        %v329 = vsub.f32 1.5, %v328
        %v330 = vmul.f32 %v325, %v329
        %vm331 = vweird.f32 %v237
        %vm332 = vweird.f32 %v325
        %vm333 = vmor %vm331, %vm332
        %v334 = vsel %vm333, %v325, %v330
        %v335 = vrsqrt.pop %v238
        %v336 = vmul.f32 %v335, %v238
        %v337 = vmul.f32 %v336, %v335
        %v338 = vmul.f32 0.5, %v337
        %v339 = vsub.f32 1.5, %v338
        %v340 = vmul.f32 %v335, %v339
        %vm341 = vweird.f32 %v238
        %vm342 = vweird.f32 %v335
        %vm343 = vmor %vm341, %vm342
        %v344 = vsel %vm343, %v335, %v340
        %v345 = vrsqrt.pop %v239
        %v346 = vmul.f32 %v345, %v239
        %v347 = vmul.f32 %v346, %v345
        %v348 = vmul.f32 0.5, %v347
        %v349 = vsub.f32 1.5, %v348
        %v350 = vmul.f32 %v345, %v349
        %vm351 = vweird.f32 %v239
        %vm352 = vweird.f32 %v345
        %vm353 = vmor %vm351, %vm352
        %v354 = vsel %vm353, %v345, %v350
        %v355 = vrsqrt.pop %v240
        %v356 = vmul.f32 %v355, %v240
        %v357 = vmul.f32 %v356, %v355
        %v358 = vmul.f32 0.5, %v357
        %v359 = vsub.f32 1.5, %v358
        %v360 = vmul.f32 %v355, %v359
        %vm361 = vweird.f32 %v240
        %vm362 = vweird.f32 %v355
        %vm363 = vmor %vm361, %vm362
        %v364 = vsel %vm363, %v355, %v360
        %v365 = vrsqrt.pop %v241
        %v366 = vmul.f32 %v365, %v241
        %v367 = vmul.f32 %v366, %v365
        %v368 = vmul.f32 0.5, %v367
        %v369 = vsub.f32 1.5, %v368
        %v370 = vmul.f32 %v365, %v369
        %vm371 = vweird.f32 %v241
        %vm372 = vweird.f32 %v365
        %vm373 = vmor %vm371, %vm372
        %v374 = vsel %vm373, %v365, %v370
        %v375 = vrsqrt.pop %v242
        %v376 = vmul.f32 %v375, %v242
        %v377 = vmul.f32 %v376, %v375
        %v378 = vmul.f32 0.5, %v377
        %v379 = vsub.f32 1.5, %v378
        %v380 = vmul.f32 %v375, %v379
        %vm381 = vweird.f32 %v242
        %vm382 = vweird.f32 %v375
        %vm383 = vmor %vm381, %vm382
        %v384 = vsel %vm383, %v375, %v380
        %v385 = vrsqrt.pop %v243
        %v386 = vmul.f32 %v385, %v243
        %v387 = vmul.f32 %v386, %v385
        %v388 = vmul.f32 0.5, %v387
        %v389 = vsub.f32 1.5, %v388
        %v390 = vmul.f32 %v385, %v389
        %vm391 = vweird.f32 %v243
        %vm392 = vweird.f32 %v385
        %vm393 = vmor %vm391, %vm392
        %v394 = vsel %vm393, %v385, %v390
        %v395 = vrsqrt.pop %v244
        %v396 = vmul.f32 %v395, %v244
        %v397 = vmul.f32 %v396, %v395
        %v398 = vmul.f32 0.5, %v397
        %v399 = vsub.f32 1.5, %v398
        %v400 = vmul.f32 %v395, %v399
        %vm401 = vweird.f32 %v244
        %vm402 = vweird.f32 %v395
        %vm403 = vmor %vm401, %vm402
        %v404 = vsel %vm403, %v395, %v400
        %v405 = vmul.f32 %v165, %v254
        %v406 = vmul.f32 %v166, %v264
        %v407 = vmul.f32 %v167, %v274
        %v408 = vmul.f32 %v168, %v284
        %v409 = vmul.f32 %v169, %v294
        %v410 = vmul.f32 %v170, %v304
        %v411 = vmul.f32 %v171, %v314
        %v412 = vmul.f32 %v172, %v324
        %v413 = vmul.f32 %v173, %v334
        %v414 = vmul.f32 %v174, %v344
        %v415 = vmul.f32 %v175, %v354
        %v416 = vmul.f32 %v176, %v364
        %v417 = vmul.f32 %v177, %v374
        %v418 = vmul.f32 %v178, %v384
        %v419 = vmul.f32 %v179, %v394
        %v420 = vmul.f32 %v180, %v404
        %v421 = vld [vmem:[%s0] sm:$0xff]
        %v422 = vld [vmem:[%s0 + $0x8] sm:$0xff]
        %423 = vmatpush.xpose.msra.mxu0 %v420
        %424 = vmatpush.xpose.msra.mxu0 %v419
        %425 = vmatpush.xpose.msra.mxu0 %v418
        %426 = vmatpush.xpose.msra.mxu0 %v417
        %427 = vmatpush.xpose.msra.mxu0 %v416
        %428 = vmatpush.xpose.msra.mxu0 %v415
        %429 = vmatpush.xpose.msra.mxu0 %v414
        %430 = vmatpush.xpose.msra.mxu0 %v413
        %431 = vmatpush.xpose.msra.mxu0 %v412
        %432 = vmatpush.xpose.msra.mxu0 %v411
        %433 = vmatpush.xpose.msra.mxu0 %v410
        %434 = vmatpush.xpose.msra.mxu0 %v409
        %435 = vmatpush.xpose.msra.mxu0 %v408
        %436 = vmatpush.xpose.msra.mxu0 %v407
        %437 = vmatpush.xpose.msra.mxu0 %v406
        %438 = vmatpush.xpose.msra.mxu0 %v405
        %439 = vmatmul.f32.gmra.mxu0 %v421
        %v440 = vpop.f32.mrf.mxu0
        %v441 = vadd.f32 0.0, %v440
        %442 = vmatmul.f32.gmra.mxu0 %v422
        %v443 = vpop.f32.mrf.mxu0
        %v444 = vadd.f32 0.0, %v443
        %445 = vdwg.mxu0
        %446 = vst [vmem:[%s163] sm:$0xff] %v441
        %447 = vst [vmem:[%s163 + $0x8] sm:$0xff] %v444
        %s448 = sand.u32 %s74, 1
        %s449 = scalar_lea.sflag [#allocation4], %s448
        %s450 = sand.u32 %s74, 1
        %s451 = smul.addr %s450, 16
        %s452 = scalar_lea.vmem [#allocation5], %s451
        // Predicated region
        $region33: #{combiner_forward.3} parent=27 // pred_check
          %p453 = pneg %p84
        $region34: #{combiner_forward.3} parent=27 // pred_check_branch
          %455 = sbr.rel (%p453) target = $region36
        $region35: #{combiner_forward.3} parent=27 // pred_region
          %457 = vsyncadd %s449, 0
          %s458 = smul.addr %s19, 8
          %s459 = scalar_lea.hbm %s2, %s458
          %s460 = sshll.u32 %s452, 4
          %s461 = int_to_ptr.vmem [resolvable:$true] %s460
          %s462 = sshll.u32 %s459, 4
          %s463 = int_to_ptr.hbm [resolvable:$true] %s462
          %468 = dma.vmem_to_hbm [thread:$0]  %s461, 256, %s463, %s449, 128, 256, 8
        $region36: #{combiner_forward.3} parent=27 // pred_fallthru
          _
      $region28: #{combiner_forward.3} parent=5 // pred_fallthru
        _
      %p469 = scmp.le.s32.totalorder 2, %s14
      // Predicated region
      $region37: #{combiner_forward.3} parent=5 // pred_check
        %p470 = pneg %p469
      $region38: #{combiner_forward.3} parent=5 // pred_check_branch
        %472 = sbr.rel (%p470) target = $region40
      $region39: #{combiner_forward.3} parent=5 // pred_region
        %s473 = ssub.s32 %s14, 2
        // Predicated region
        $region41: #{combiner_forward.3} parent=39 // pred_check
          %p474 = pneg %p90
        $region42: #{combiner_forward.3} parent=39 // pred_check_branch
          %476 = sbr.rel (%p474) target = $region44
        $region43: #{combiner_forward.3} parent=39 // pred_region
          %s477 = sand.u32 %s75, 1
          %s478 = scalar_lea.sflag [#allocation4], %s477
          %s479 = sand.u32 %s75, 1
          %s480 = smul.addr %s479, 16
          %s481 = scalar_lea.vmem [#allocation5], %s480
          %483 = dma.done %s478, 256
        $region44: #{combiner_forward.3} parent=39 // pred_fallthru
          _
      $region40: #{combiner_forward.3} parent=5 // pred_fallthru
        _
    $region6: #{combiner_forward.3} parent=1 // loop_footer
      %s18 = sadd.s32 1, %s14
    $region7: #{combiner_forward.3} parent=1 // loop_footer_branch
      %13 = sbr.rel target = $region3
    $region8: #{combiner_forward.3} parent=1 // loop_exit
      _
    %484 = vsyncpa [#allocation3], 1
    %s485 = scalar_lea.sflag [#allocation3], 1
    %486 = vsyncpa %s485, 1
    %487 = vsyncpa [#allocation4], 1
    %s488 = scalar_lea.sflag [#allocation4], 1
    %489 = vsyncpa %s488, 1

</llo_original>
